<compile_context>
chip_gen: v7x
topology: tpu7x:2x2x1
jax: 0.10.0
libtpu: 0.0.40
codegen_flags: <defaults>
</compile_context>

<pallas_src>
from functools import partial

import jax
import jax.numpy as jnp
from jax.experimental import pallas as pl
from jax.experimental.pallas import tpu as pltpu


def conv1d_head_kernel(x_ref, w1_ref, b1_ref, gamma_ref, beta_ref,
                       gs_ref, gst_ref, w2_ref, b2_ref, o_ref,
                       *, Bt, L, K, eps, norm_inv, mm_dtype):
    """Fused Conv1d -> GroupNorm -> Mish -> Conv1d over Bt batch elements.

    x_ref   : (M, Cin)       channels-last input rows, M = Bt*L (L rows/batch)
    w1_ref  : (K, Cin, C1)   conv-1 weights, per-tap layout, mm_dtype
    b1_ref  : (1, C1)        conv-1 bias (f32)
    gamma_ref, beta_ref: (1, C1)  GroupNorm affine (f32)
    gs_ref  : (C1, G)        0/1 channel->group membership (f32)
    gst_ref : (G, C1)        its transpose (group->channel broadcast)
    w2_ref  : (K, C1, Cout)  conv-2 weights, per-tap layout, mm_dtype
    b2_ref  : (1, Cout)
    o_ref   : (M, Cout)      channels-last output rows
    """
    M = Bt * L
    C1 = w1_ref.shape[2]
    pad = (K - 1) // 2

    # ---- Boundary masks, hoisted once and shared by both convs.
    # Row m is within-sequence position l = m % L; tap shift s reads l+s,
    # which must stay inside [0, L-1] (zero padding otherwise).  Rows where a
    # sublane roll wraps across a batch element are exactly the masked rows.
    l_in = jax.lax.broadcasted_iota(jnp.int32, (M, 1), 0) % L
    tap_mask = []
    for k in range(K):
        s = k - pad
        if s == 0:
            tap_mask.append(None)
        else:
            tap_mask.append(
                ((l_in + s >= 0) & (l_in + s <= L - 1)).astype(jnp.float32))

    # ---- Conv1d #1: K accumulated matmuls over rolled+masked INPUTS
    # (Cin is tiny, so rolling the input is the cheap side).  f32 accumulate.
    x2 = x_ref[...].astype(jnp.float32)                        # (M, Cin)
    y1 = None
    for k in range(K):
        s = k - pad
        if s == 0:
            zk = x2
        else:
            zk = pltpu.roll(x2, (-s) % M, axis=0) * tap_mask[k]
        part = jnp.dot(zk.astype(mm_dtype), w1_ref[k],
                       preferred_element_type=jnp.float32)     # (M, C1)
        y1 = part if y1 is None else y1 + part
    y1 = y1 + b1_ref[...]                                       # (M, C1) f32

    # ---- GroupNorm: per-batch sums via sublane reduce on (Bt, L, C1), then
    # tiny channel->group indicator matmuls; all statistics kept in f32.
    y1_3 = y1.reshape(Bt, L, C1)
    s1 = jnp.sum(y1_3, axis=1)                                  # (Bt, C1)
    s2 = jnp.sum(y1_3 * y1_3, axis=1)                           # (Bt, C1)
    g1 = jnp.dot(s1, gs_ref[...], preferred_element_type=jnp.float32)  # (Bt, G)
    g2 = jnp.dot(s2, gs_ref[...], preferred_element_type=jnp.float32)
    gmean = g1 * norm_inv
    # Single-pass E[x^2]-mean^2 in f32 (matches the previously validated
    # kernel); switch to a two-pass form if activations can be very large.
    gvar = g2 * norm_inv - gmean * gmean                        # biased var
    ginv = jax.lax.rsqrt(gvar + eps)
    mean_c = jnp.dot(gmean, gst_ref[...], preferred_element_type=jnp.float32)
    inv_c = jnp.dot(ginv, gst_ref[...], preferred_element_type=jnp.float32)
    scale_c = inv_c * gamma_ref[...]                            # (Bt, C1)
    shift_c = beta_ref[...] - mean_c * scale_c                  # (Bt, C1)
    yn = y1_3 * scale_c[:, None, :] + shift_c[:, None, :]       # (Bt, L, C1)

    # ---- Mish with a single exp:  tanh(softplus(x)) = (sp2-1)/(sp2+1),
    # sp2 = (1+e^x)^2; guard large x (mish(x) -> x) to avoid exp overflow.
    t = jnp.exp(jnp.minimum(yn, 20.0))
    sp2 = (1.0 + t) * (1.0 + t)
    y3 = jnp.where(yn > 20.0, yn, yn * ((sp2 - 1.0) / (sp2 + 1.0)))

    # ---- Conv1d #2: matmuls on the UNROLLED activation; roll+mask the tiny
    # (M, Cout) per-tap OUTPUTS instead of the (M, C1) input (Cout << C1).
    y3m = y3.reshape(M, C1).astype(mm_dtype)                    # one cast
    y4 = None
    for k in range(K):
        s = k - pad
        pk = jnp.dot(y3m, w2_ref[k],
                     preferred_element_type=jnp.float32)        # (M, Cout)
        if s != 0:
            pk = pltpu.roll(pk, (-s) % M, axis=0) * tap_mask[k]
        y4 = pk if y4 is None else y4 + pk
    y4 = y4 + b2_ref[...]                                       # (M, Cout)

    # ---- One contiguous channels-last store; the tiny NCL transpose + flatten
    # happens in the wrapper.
    o_ref[...] = y4.astype(o_ref.dtype)


def _pick_block_batch(B, L, target_rows=512):
    """Largest divisor Bt of B with Bt*L <= target_rows (amortizes per-step
    overhead; kernel is not MXU-bound).  Prefer keeping >= 2 grid steps
    (v7x has 2 TensorCores; >=2 steps also enables DMA/compute overlap) as
    long as each step still carries >= 128 rows."""
    divisors = [d for d in range(1, B + 1) if B % d == 0]
    fitting = [d for d in divisors if d * L <= target_rows] or [1]
    bt = max(fitting)
    if B // bt < 2:
        alt = [d for d in fitting if B // d >= 2 and d * L >= 128]
        if alt:
            bt = max(alt)
    return bt


def conv1d_head_forward(x, params, *, n_groups, eps=1e-5,
                        matmul_dtype=jnp.bfloat16, target_rows=512):
    """x: (B, Cin, L) float32, PyTorch NCL layout.  Returns (B, Cout*L)."""
    W1, b1, gamma, beta, W2, b2 = params
    B, Cin, L = x.shape
    C1, _, K = W1.shape
    Cout = W2.shape[0]
    assert K % 2 == 1, "only odd kernel sizes (PyTorch default K=3) supported"
    assert C1 % n_groups == 0
    cpg = C1 // n_groups
    Bt = _pick_block_batch(B, L, target_rows)
    M = Bt * L

    # One-time, tiny layout/weight prep in the wrapper (pipelined by XLA).
    x_cl = jnp.transpose(x, (0, 2, 1)).reshape(B * L, Cin)      # channels-last
    w1t = jnp.transpose(W1, (2, 1, 0)).astype(matmul_dtype)     # (K, Cin, C1)
    w2t = jnp.transpose(W2, (2, 1, 0)).astype(matmul_dtype)     # (K, C1, Cout)
    gids = jnp.arange(C1) // cpg
    gsmall = (gids[:, None] == jnp.arange(n_groups)[None, :]).astype(jnp.float32)
    gsmall_t = gsmall.T

    kernel = partial(conv1d_head_kernel, Bt=Bt, L=L, K=K, eps=eps,
                     norm_inv=1.0 / float(L * cpg), mm_dtype=matmul_dtype)

    out_cl = pl.pallas_call(
        kernel,
        out_shape=jax.ShapeDtypeStruct((B * L, Cout), x.dtype),
        grid_spec=pltpu.PrefetchScalarGridSpec(
            num_scalar_prefetch=0,
            grid=(B // Bt,),
            in_specs=[
                pl.BlockSpec((M, Cin), lambda i: (i, 0)),        # input rows
                pl.BlockSpec((K, Cin, C1), lambda i: (0, 0, 0)),
                pl.BlockSpec((1, C1), lambda i: (0, 0)),
                pl.BlockSpec((1, C1), lambda i: (0, 0)),
                pl.BlockSpec((1, C1), lambda i: (0, 0)),
                pl.BlockSpec((C1, n_groups), lambda i: (0, 0)),
                pl.BlockSpec((n_groups, C1), lambda i: (0, 0)),
                pl.BlockSpec((K, C1, Cout), lambda i: (0, 0, 0)),
                pl.BlockSpec((1, Cout), lambda i: (0, 0)),
            ],
            out_specs=pl.BlockSpec((M, Cout), lambda i: (i, 0)),
        ),
        compiler_params=pltpu.CompilerParams(
            dimension_semantics=("parallel",)),
    )(x_cl, w1t, b1.reshape(1, C1), gamma.reshape(1, C1), beta.reshape(1, C1),
      gsmall, gsmall_t, w2t, b2.reshape(1, Cout))

    # (B*L, Cout) -> (B, Cout, L) -> (B, Cout*L): matches PyTorch's .view(B,-1)
    # on NCL output; touches only B*Cout*L elements (KBs).
    return jnp.transpose(out_cl.reshape(B, L, Cout), (0, 2, 1)).reshape(B, Cout * L)


def reference_forward(x, params, *, n_groups, eps=1e-5):
    """Pure-JAX f32 reference of the PyTorch forward (correctness check)."""
    W1, b1, gamma, beta, W2, b2 = params
    B, Cin, L = x.shape
    C1, _, K = W1.shape
    pad = K // 2
    dn = ('NCH', 'OIH', 'NCH')
    y1 = jax.lax.conv_general_dilated(x, W1, (1,), [(pad, pad)],
                                      dimension_numbers=dn) + b1[None, :, None]
    cpg = C1 // n_groups
    yg = y1.reshape(B, n_groups, cpg, L)
    mean = yg.mean(axis=(2, 3), keepdims=True)
    var = ((yg - mean) ** 2).mean(axis=(2, 3), keepdims=True)
    yn = ((yg - mean) / jnp.sqrt(var + eps)).reshape(B, C1, L)
    yn = yn * gamma[None, :, None] + beta[None, :, None]
    y3 = yn * jnp.tanh(jax.nn.softplus(yn))
    y4 = jax.lax.conv_general_dilated(y3, W2, (1,), [(pad, pad)],
                                      dimension_numbers=dn) + b2[None, :, None]
    return y4.reshape(B, -1)


if __name__ == "__main__":
    # Module hyper-params (small, consistent with Conv1D.__init__ defaults).
    input_dim = 10          # Cin
    width = 64              # widths[0] (kept small instead of 512)
    kernel_size = 3
    n_groups = 8
    output_dim = 8
    action_horizon = 4
    out_ch = output_dim // action_horizon   # Cout = 2

    B, L = 2, 16            # batch, sequence length

    key = jax.random.PRNGKey(0)
    k = jax.random.split(key, 7)
    # Deterministic synthetic parameters (shapes mirror the nn.Module's).
    W1 = 0.1 * jax.random.normal(k[0], (width, input_dim, kernel_size), jnp.float32)
    b1 = 0.1 * jax.random.normal(k[1], (width,), jnp.float32)
    gamma = 1.0 + 0.05 * jax.random.normal(k[2], (width,), jnp.float32)
    beta = 0.05 * jax.random.normal(k[3], (width,), jnp.float32)
    W2 = 0.1 * jax.random.normal(k[4], (out_ch, width, kernel_size), jnp.float32)
    b2 = 0.1 * jax.random.normal(k[5], (out_ch,), jnp.float32)
    params = (W1, b1, gamma, beta, W2, b2)

    x = jax.random.normal(k[6], (B, input_dim, L), jnp.float32)   # NCL, as Conv1d expects

    ref = jax.block_until_ready(reference_forward(x, params, n_groups=n_groups))

    # 1) f32 matmul path: strict correctness gate against the f32 reference.
    out_f32 = jax.block_until_ready(
        conv1d_head_forward(x, params, n_groups=n_groups,
                            matmul_dtype=jnp.float32))
    assert out_f32.shape == (B, out_ch * L), out_f32.shape
    assert jnp.allclose(out_f32, ref, atol=5e-4, rtol=5e-4), \
        float(jnp.abs(out_f32 - ref).max())

    # 2) Default bf16-matmul-operand path (MXU-native); f32 accumulation and
    #    f32 GroupNorm/Mish keep the drift small, but the tolerance must be
    #    looser than an all-f32 comparison.
    out_bf16 = jax.block_until_ready(
        conv1d_head_forward(x, params, n_groups=n_groups))
    assert out_bf16.shape == (B, out_ch * L), out_bf16.shape
    assert float(jnp.max(jnp.abs(out_bf16 - ref))) < 1e-1, \
        float(jnp.abs(out_bf16 - ref).max())

    print("KERNEL_OK")
</pallas_src>

<mosaic_0001>
module attributes {stable_mosaic.version = 11 : i64} {
  func.func @conv1d_head_kernel(%arg0: i32, %arg1: memref<32x10xf32, #tpu.memory_space<vmem>>, %arg2: memref<3x10x64xf32, #tpu.memory_space<vmem>>, %arg3: memref<1x64xf32, #tpu.memory_space<vmem>>, %arg4: memref<1x64xf32, #tpu.memory_space<vmem>>, %arg5: memref<1x64xf32, #tpu.memory_space<vmem>>, %arg6: memref<64x8xf32, #tpu.memory_space<vmem>>, %arg7: memref<8x64xf32, #tpu.memory_space<vmem>>, %arg8: memref<3x64x2xf32, #tpu.memory_space<vmem>>, %arg9: memref<1x2xf32, #tpu.memory_space<vmem>>, %arg10: memref<32x2xf32, #tpu.memory_space<vmem>>) attributes {dimension_semantics = [#tpu.dimension_semantics<parallel>], iteration_bounds = array<i64: 1>, scalar_prefetch = 0 : i64, scratch_operands = 0 : i64, tpu.core_type = #tpu.core_type<tc>, window_params = [{transform_indices = @transform_0, window_bounds = array<i64: 32, 10>}, {pipeline_mode = #tpu.pipeline_mode<synchronous>, transform_indices = @transform_1, window_bounds = array<i64: 3, 10, 64>}, {pipeline_mode = #tpu.pipeline_mode<synchronous>, transform_indices = @transform_2, window_bounds = array<i64: 1, 64>}, {pipeline_mode = #tpu.pipeline_mode<synchronous>, transform_indices = @transform_3, window_bounds = array<i64: 1, 64>}, {pipeline_mode = #tpu.pipeline_mode<synchronous>, transform_indices = @transform_4, window_bounds = array<i64: 1, 64>}, {pipeline_mode = #tpu.pipeline_mode<synchronous>, transform_indices = @transform_5, window_bounds = array<i64: 64, 8>}, {pipeline_mode = #tpu.pipeline_mode<synchronous>, transform_indices = @transform_6, window_bounds = array<i64: 8, 64>}, {pipeline_mode = #tpu.pipeline_mode<synchronous>, transform_indices = @transform_7, window_bounds = array<i64: 3, 64, 2>}, {pipeline_mode = #tpu.pipeline_mode<synchronous>, transform_indices = @transform_8, window_bounds = array<i64: 1, 2>}, {transform_indices = @transform_9, window_bounds = array<i64: 32, 2>}]} {
    %0 = tpu.iota {dimensions = array<i32: 0>} : vector<32x1xi32>
    %c16_i32 = arith.constant 16 : i32
    %c0_i32 = arith.constant 0 : i32
    %1 = arith.cmpi eq, %c16_i32, %c0_i32 : i32
    %c1_i32 = arith.constant 1 : i32
    %2 = arith.select %1, %c1_i32, %c16_i32 : i32
    %3 = vector.broadcast %2 : i32 to vector<32x1xi32>
    %4 = arith.remsi %0, %3 : vector<32x1xi32>
    %c0_i32_0 = arith.constant 0 : i32
    %5 = vector.broadcast %c0_i32_0 : i32 to vector<32x1xi32>
    %6 = arith.cmpi ne, %4, %5 : vector<32x1xi32>
    %c0_i32_1 = arith.constant 0 : i32
    %7 = vector.broadcast %c0_i32_1 : i32 to vector<32x1xi32>
    %8 = arith.cmpi slt, %4, %7 : vector<32x1xi32>
    %c0_i32_2 = arith.constant 0 : i32
    %9 = arith.cmpi slt, %2, %c0_i32_2 : i32
    %10 = vector.broadcast %9 : i1 to vector<32x1xi1>
    %11 = vector.broadcast %10 : vector<32x1xi1> to vector<32x1xi1>
    %12 = arith.xori %8, %11 : vector<32x1xi1>
    %13 = arith.andi %12, %6 : vector<32x1xi1>
    %14 = vector.broadcast %2 : i32 to vector<32x1xi32>
    %15 = arith.addi %4, %14 : vector<32x1xi32>
    %16 = arith.select %13, %15, %4 : vector<32x1xi1>, vector<32x1xi32>
    %c-1_i32 = arith.constant -1 : i32
    %17 = vector.broadcast %c-1_i32 : i32 to vector<32x1xi32>
    %18 = arith.addi %16, %17 : vector<32x1xi32>
    %c0_i32_3 = arith.constant 0 : i32
    %19 = vector.broadcast %c0_i32_3 : i32 to vector<32x1xi32>
    %20 = arith.cmpi sge, %18, %19 : vector<32x1xi32>
    %c-1_i32_4 = arith.constant -1 : i32
    %21 = vector.broadcast %c-1_i32_4 : i32 to vector<32x1xi32>
    %22 = arith.addi %16, %21 : vector<32x1xi32>
    %c15_i32 = arith.constant 15 : i32
    %23 = vector.broadcast %c15_i32 : i32 to vector<32x1xi32>
    %24 = arith.cmpi sle, %22, %23 : vector<32x1xi32>
    %25 = arith.andi %20, %24 : vector<32x1xi1>
    %26 = arith.extui %25 : vector<32x1xi1> to vector<32x1xi32>
    %27 = arith.sitofp %26 : vector<32x1xi32> to vector<32x1xf32>
    %c1_i32_5 = arith.constant 1 : i32
    %28 = vector.broadcast %c1_i32_5 : i32 to vector<32x1xi32>
    %29 = arith.addi %16, %28 : vector<32x1xi32>
    %c0_i32_6 = arith.constant 0 : i32
    %30 = vector.broadcast %c0_i32_6 : i32 to vector<32x1xi32>
    %31 = arith.cmpi sge, %29, %30 : vector<32x1xi32>
    %c1_i32_7 = arith.constant 1 : i32
    %32 = vector.broadcast %c1_i32_7 : i32 to vector<32x1xi32>
    %33 = arith.addi %16, %32 : vector<32x1xi32>
    %c15_i32_8 = arith.constant 15 : i32
    %34 = vector.broadcast %c15_i32_8 : i32 to vector<32x1xi32>
    %35 = arith.cmpi sle, %33, %34 : vector<32x1xi32>
    %36 = arith.andi %31, %35 : vector<32x1xi1>
    %37 = arith.extui %36 : vector<32x1xi1> to vector<32x1xi32>
    %38 = arith.sitofp %37 : vector<32x1xi32> to vector<32x1xf32>
    %c0 = arith.constant 0 : index
    %c0_9 = arith.constant 0 : index
    %39 = vector.load %arg1[%c0, %c0_9] : memref<32x10xf32, #tpu.memory_space<vmem>>, vector<32x10xf32>
    %c1_i32_10 = arith.constant 1 : i32
    %40 = tpu.dynamic_rotate %39 by %c1_i32_10 dim 0 : vector<32x10xf32>, i32 -> vector<32x10xf32>
    %41 = vector.broadcast %27 : vector<32x1xf32> to vector<32x10xf32>
    %42 = arith.mulf %40, %41 : vector<32x10xf32>
    %c0_11 = arith.constant 0 : index
    %c0_12 = arith.constant 0 : index
    %c0_13 = arith.constant 0 : index
    %43 = vector.load %arg2[%c0_11, %c0_12, %c0_13] : memref<3x10x64xf32, #tpu.memory_space<vmem>>, vector<1x10x64xf32>
    %44 = vector.shape_cast %43 : vector<1x10x64xf32> to vector<10x64xf32>
    %cst = arith.constant dense<0.000000e+00> : vector<32x64xf32>
    %45 = tpu.matmul %42, %44, %cst {dimension_numbers = #tpu.dot_dimension_numbers<[1], [0], [0], [1], [0, 0, 1, 1], [], []>} : vector<32x10xf32>, vector<10x64xf32>, vector<32x64xf32> -> vector<32x64xf32>
    %c1 = arith.constant 1 : index
    %c0_14 = arith.constant 0 : index
    %c0_15 = arith.constant 0 : index
    %46 = vector.load %arg2[%c1, %c0_14, %c0_15] : memref<3x10x64xf32, #tpu.memory_space<vmem>>, vector<1x10x64xf32>
    %47 = vector.shape_cast %46 : vector<1x10x64xf32> to vector<10x64xf32>
    %cst_16 = arith.constant dense<0.000000e+00> : vector<32x64xf32>
    %48 = tpu.matmul %39, %47, %cst_16 {dimension_numbers = #tpu.dot_dimension_numbers<[1], [0], [0], [1], [0, 0, 1, 1], [], []>} : vector<32x10xf32>, vector<10x64xf32>, vector<32x64xf32> -> vector<32x64xf32>
    %49 = arith.addf %45, %48 : vector<32x64xf32>
    %c31_i32 = arith.constant 31 : i32
    %50 = tpu.dynamic_rotate %39 by %c31_i32 dim 0 : vector<32x10xf32>, i32 -> vector<32x10xf32>
    %51 = vector.broadcast %38 : vector<32x1xf32> to vector<32x10xf32>
    %52 = arith.mulf %50, %51 : vector<32x10xf32>
    %c2 = arith.constant 2 : index
    %c0_17 = arith.constant 0 : index
    %c0_18 = arith.constant 0 : index
    %53 = vector.load %arg2[%c2, %c0_17, %c0_18] : memref<3x10x64xf32, #tpu.memory_space<vmem>>, vector<1x10x64xf32>
    %54 = vector.shape_cast %53 : vector<1x10x64xf32> to vector<10x64xf32>
    %cst_19 = arith.constant dense<0.000000e+00> : vector<32x64xf32>
    %55 = tpu.matmul %52, %54, %cst_19 {dimension_numbers = #tpu.dot_dimension_numbers<[1], [0], [0], [1], [0, 0, 1, 1], [], []>} : vector<32x10xf32>, vector<10x64xf32>, vector<32x64xf32> -> vector<32x64xf32>
    %56 = arith.addf %49, %55 : vector<32x64xf32>
    %c0_20 = arith.constant 0 : index
    %c0_21 = arith.constant 0 : index
    %57 = vector.load %arg3[%c0_20, %c0_21] : memref<1x64xf32, #tpu.memory_space<vmem>>, vector<1x64xf32>
    %58 = vector.broadcast %57 : vector<1x64xf32> to vector<32x64xf32>
    %59 = arith.addf %56, %58 : vector<32x64xf32>
    %60 = vector.shape_cast %59 : vector<32x64xf32> to vector<2x16x64xf32>
    %cst_22 = arith.constant dense<0.000000e+00> : vector<2x64xf32>
    %61 = vector.multi_reduction <add>, %60, %cst_22 [1] : vector<2x16x64xf32> to vector<2x64xf32>
    %62 = arith.mulf %60, %60 : vector<2x16x64xf32>
    %cst_23 = arith.constant dense<0.000000e+00> : vector<2x64xf32>
    %63 = vector.multi_reduction <add>, %62, %cst_23 [1] : vector<2x16x64xf32> to vector<2x64xf32>
    %c0_24 = arith.constant 0 : index
    %c0_25 = arith.constant 0 : index
    %64 = vector.load %arg6[%c0_24, %c0_25] : memref<64x8xf32, #tpu.memory_space<vmem>>, vector<64x8xf32>
    %cst_26 = arith.constant dense<0.000000e+00> : vector<2x8xf32>
    %65 = tpu.matmul %61, %64, %cst_26 {dimension_numbers = #tpu.dot_dimension_numbers<[1], [0], [0], [1], [0, 0, 1, 1], [], []>} : vector<2x64xf32>, vector<64x8xf32>, vector<2x8xf32> -> vector<2x8xf32>
    %c0_27 = arith.constant 0 : index
    %c0_28 = arith.constant 0 : index
    %66 = vector.load %arg6[%c0_27, %c0_28] : memref<64x8xf32, #tpu.memory_space<vmem>>, vector<64x8xf32>
    %cst_29 = arith.constant dense<0.000000e+00> : vector<2x8xf32>
    %67 = tpu.matmul %63, %66, %cst_29 {dimension_numbers = #tpu.dot_dimension_numbers<[1], [0], [0], [1], [0, 0, 1, 1], [], []>} : vector<2x64xf32>, vector<64x8xf32>, vector<2x8xf32> -> vector<2x8xf32>
    %cst_30 = arith.constant 7.812500e-03 : f32
    %68 = vector.broadcast %cst_30 : f32 to vector<2x8xf32>
    %69 = arith.mulf %65, %68 : vector<2x8xf32>
    %cst_31 = arith.constant 7.812500e-03 : f32
    %70 = vector.broadcast %cst_31 : f32 to vector<2x8xf32>
    %71 = arith.mulf %67, %70 : vector<2x8xf32>
    %72 = arith.mulf %69, %69 : vector<2x8xf32>
    %73 = arith.subf %71, %72 : vector<2x8xf32>
    %cst_32 = arith.constant 9.99999974E-6 : f32
    %74 = vector.broadcast %cst_32 : f32 to vector<2x8xf32>
    %75 = arith.addf %73, %74 : vector<2x8xf32>
    %76 = math.rsqrt %75 : vector<2x8xf32>
    %c0_33 = arith.constant 0 : index
    %c0_34 = arith.constant 0 : index
    %77 = vector.load %arg7[%c0_33, %c0_34] : memref<8x64xf32, #tpu.memory_space<vmem>>, vector<8x64xf32>
    %cst_35 = arith.constant dense<0.000000e+00> : vector<2x64xf32>
    %78 = tpu.matmul %69, %77, %cst_35 {dimension_numbers = #tpu.dot_dimension_numbers<[1], [0], [0], [1], [0, 0, 1, 1], [], []>} : vector<2x8xf32>, vector<8x64xf32>, vector<2x64xf32> -> vector<2x64xf32>
    %c0_36 = arith.constant 0 : index
    %c0_37 = arith.constant 0 : index
    %79 = vector.load %arg7[%c0_36, %c0_37] : memref<8x64xf32, #tpu.memory_space<vmem>>, vector<8x64xf32>
    %cst_38 = arith.constant dense<0.000000e+00> : vector<2x64xf32>
    %80 = tpu.matmul %76, %79, %cst_38 {dimension_numbers = #tpu.dot_dimension_numbers<[1], [0], [0], [1], [0, 0, 1, 1], [], []>} : vector<2x8xf32>, vector<8x64xf32>, vector<2x64xf32> -> vector<2x64xf32>
    %c0_39 = arith.constant 0 : index
    %c0_40 = arith.constant 0 : index
    %81 = vector.load %arg4[%c0_39, %c0_40] : memref<1x64xf32, #tpu.memory_space<vmem>>, vector<1x64xf32>
    %82 = vector.broadcast %81 : vector<1x64xf32> to vector<2x64xf32>
    %83 = arith.mulf %80, %82 : vector<2x64xf32>
    %c0_41 = arith.constant 0 : index
    %c0_42 = arith.constant 0 : index
    %84 = vector.load %arg5[%c0_41, %c0_42] : memref<1x64xf32, #tpu.memory_space<vmem>>, vector<1x64xf32>
    %85 = arith.mulf %78, %83 : vector<2x64xf32>
    %86 = vector.broadcast %84 : vector<1x64xf32> to vector<2x64xf32>
    %87 = arith.subf %86, %85 : vector<2x64xf32>
    %88 = vector.shape_cast %83 : vector<2x64xf32> to vector<2x1x64xf32>
    %89 = vector.broadcast %88 : vector<2x1x64xf32> to vector<2x16x64xf32>
    %90 = arith.mulf %60, %89 : vector<2x16x64xf32>
    %91 = vector.shape_cast %87 : vector<2x64xf32> to vector<2x1x64xf32>
    %92 = vector.broadcast %91 : vector<2x1x64xf32> to vector<2x16x64xf32>
    %93 = arith.addf %90, %92 : vector<2x16x64xf32>
    %cst_43 = arith.constant 2.000000e+01 : f32
    %94 = vector.broadcast %cst_43 : f32 to vector<2x16x64xf32>
    %95 = arith.minimumf %93, %94 : vector<2x16x64xf32>
    %96 = math.exp %95 : vector<2x16x64xf32>
    %cst_44 = arith.constant 1.000000e+00 : f32
    %97 = vector.broadcast %cst_44 : f32 to vector<2x16x64xf32>
    %98 = arith.addf %97, %96 : vector<2x16x64xf32>
    %cst_45 = arith.constant 1.000000e+00 : f32
    %99 = vector.broadcast %cst_45 : f32 to vector<2x16x64xf32>
    %100 = arith.addf %99, %96 : vector<2x16x64xf32>
    %101 = arith.mulf %98, %100 : vector<2x16x64xf32>
    %cst_46 = arith.constant 2.000000e+01 : f32
    %102 = vector.broadcast %cst_46 : f32 to vector<2x16x64xf32>
    %103 = arith.cmpf ogt, %93, %102 : vector<2x16x64xf32>
    %cst_47 = arith.constant 1.000000e+00 : f32
    %104 = vector.broadcast %cst_47 : f32 to vector<2x16x64xf32>
    %105 = arith.subf %101, %104 : vector<2x16x64xf32>
    %cst_48 = arith.constant 1.000000e+00 : f32
    %106 = vector.broadcast %cst_48 : f32 to vector<2x16x64xf32>
    %107 = arith.addf %101, %106 : vector<2x16x64xf32>
    %108 = arith.divf %105, %107 : vector<2x16x64xf32>
    %109 = arith.mulf %93, %108 : vector<2x16x64xf32>
    %110 = arith.select %103, %93, %109 : vector<2x16x64xi1>, vector<2x16x64xf32>
    %111 = vector.shape_cast %110 : vector<2x16x64xf32> to vector<32x64xf32>
    %c0_49 = arith.constant 0 : index
    %c0_50 = arith.constant 0 : index
    %c0_51 = arith.constant 0 : index
    %112 = vector.load %arg8[%c0_49, %c0_50, %c0_51] : memref<3x64x2xf32, #tpu.memory_space<vmem>>, vector<1x64x2xf32>
    %113 = vector.shape_cast %112 : vector<1x64x2xf32> to vector<64x2xf32>
    %cst_52 = arith.constant dense<0.000000e+00> : vector<32x2xf32>
    %114 = tpu.matmul %111, %113, %cst_52 {dimension_numbers = #tpu.dot_dimension_numbers<[1], [0], [0], [1], [0, 0, 1, 1], [], []>} : vector<32x64xf32>, vector<64x2xf32>, vector<32x2xf32> -> vector<32x2xf32>
    %c1_i32_53 = arith.constant 1 : i32
    %115 = tpu.dynamic_rotate %114 by %c1_i32_53 dim 0 : vector<32x2xf32>, i32 -> vector<32x2xf32>
    %116 = vector.broadcast %27 : vector<32x1xf32> to vector<32x2xf32>
    %117 = arith.mulf %115, %116 : vector<32x2xf32>
    %c1_54 = arith.constant 1 : index
    %c0_55 = arith.constant 0 : index
    %c0_56 = arith.constant 0 : index
    %118 = vector.load %arg8[%c1_54, %c0_55, %c0_56] : memref<3x64x2xf32, #tpu.memory_space<vmem>>, vector<1x64x2xf32>
    %119 = vector.shape_cast %118 : vector<1x64x2xf32> to vector<64x2xf32>
    %cst_57 = arith.constant dense<0.000000e+00> : vector<32x2xf32>
    %120 = tpu.matmul %111, %119, %cst_57 {dimension_numbers = #tpu.dot_dimension_numbers<[1], [0], [0], [1], [0, 0, 1, 1], [], []>} : vector<32x64xf32>, vector<64x2xf32>, vector<32x2xf32> -> vector<32x2xf32>
    %121 = arith.addf %117, %120 : vector<32x2xf32>
    %c2_58 = arith.constant 2 : index
    %c0_59 = arith.constant 0 : index
    %c0_60 = arith.constant 0 : index
    %122 = vector.load %arg8[%c2_58, %c0_59, %c0_60] : memref<3x64x2xf32, #tpu.memory_space<vmem>>, vector<1x64x2xf32>
    %123 = vector.shape_cast %122 : vector<1x64x2xf32> to vector<64x2xf32>
    %cst_61 = arith.constant dense<0.000000e+00> : vector<32x2xf32>
    %124 = tpu.matmul %111, %123, %cst_61 {dimension_numbers = #tpu.dot_dimension_numbers<[1], [0], [0], [1], [0, 0, 1, 1], [], []>} : vector<32x64xf32>, vector<64x2xf32>, vector<32x2xf32> -> vector<32x2xf32>
    %c31_i32_62 = arith.constant 31 : i32
    %125 = tpu.dynamic_rotate %124 by %c31_i32_62 dim 0 : vector<32x2xf32>, i32 -> vector<32x2xf32>
    %126 = vector.broadcast %38 : vector<32x1xf32> to vector<32x2xf32>
    %127 = arith.mulf %125, %126 : vector<32x2xf32>
    %128 = arith.addf %121, %127 : vector<32x2xf32>
    %c0_63 = arith.constant 0 : index
    %c0_64 = arith.constant 0 : index
    %129 = vector.load %arg9[%c0_63, %c0_64] : memref<1x2xf32, #tpu.memory_space<vmem>>, vector<1x2xf32>
    %130 = vector.broadcast %129 : vector<1x2xf32> to vector<32x2xf32>
    %131 = arith.addf %128, %130 : vector<32x2xf32>
    %c0_65 = arith.constant 0 : index
    %c0_66 = arith.constant 0 : index
    %132 = vector.load %arg10[%c0_65, %c0_66] : memref<32x2xf32, #tpu.memory_space<vmem>>, vector<32x2xf32>
    tpu.vector_store %arg10[%c0_65, %c0_66], %131 {strides = array<i32>} : memref<32x2xf32, #tpu.memory_space<vmem>>, vector<32x2xf32>,
    return
  }
  func.func @transform_0(%arg0: i32) -> (i32, i32) {
    %c0_i32 = arith.constant 0 : i32
    %c0_i32_0 = arith.constant 0 : i32
    return %arg0, %c0_i32 : i32, i32
  }
  func.func @transform_1(%arg0: i32) -> (i32, i32, i32) {
    %c0_i32 = arith.constant 0 : i32
    %c0_i32_0 = arith.constant 0 : i32
    %c0_i32_1 = arith.constant 0 : i32
    %c0_i32_2 = arith.constant 0 : i32
    return %c0_i32, %c0_i32_0, %c0_i32_1 : i32, i32, i32
  }
  func.func @transform_2(%arg0: i32) -> (i32, i32) {
    %c0_i32 = arith.constant 0 : i32
    %c0_i32_0 = arith.constant 0 : i32
    %c0_i32_1 = arith.constant 0 : i32
    return %c0_i32, %c0_i32_0 : i32, i32
  }
  func.func @transform_3(%arg0: i32) -> (i32, i32) {
    %c0_i32 = arith.constant 0 : i32
    %c0_i32_0 = arith.constant 0 : i32
    %c0_i32_1 = arith.constant 0 : i32
    return %c0_i32, %c0_i32_0 : i32, i32
  }
  func.func @transform_4(%arg0: i32) -> (i32, i32) {
    %c0_i32 = arith.constant 0 : i32
    %c0_i32_0 = arith.constant 0 : i32
    %c0_i32_1 = arith.constant 0 : i32
    return %c0_i32, %c0_i32_0 : i32, i32
  }
  func.func @transform_5(%arg0: i32) -> (i32, i32) {
    %c0_i32 = arith.constant 0 : i32
    %c0_i32_0 = arith.constant 0 : i32
    %c0_i32_1 = arith.constant 0 : i32
    return %c0_i32, %c0_i32_0 : i32, i32
  }
  func.func @transform_6(%arg0: i32) -> (i32, i32) {
    %c0_i32 = arith.constant 0 : i32
    %c0_i32_0 = arith.constant 0 : i32
    %c0_i32_1 = arith.constant 0 : i32
    return %c0_i32, %c0_i32_0 : i32, i32
  }
  func.func @transform_7(%arg0: i32) -> (i32, i32, i32) {
    %c0_i32 = arith.constant 0 : i32
    %c0_i32_0 = arith.constant 0 : i32
    %c0_i32_1 = arith.constant 0 : i32
    %c0_i32_2 = arith.constant 0 : i32
    return %c0_i32, %c0_i32_0, %c0_i32_1 : i32, i32, i32
  }
  func.func @transform_8(%arg0: i32) -> (i32, i32) {
    %c0_i32 = arith.constant 0 : i32
    %c0_i32_0 = arith.constant 0 : i32
    %c0_i32_1 = arith.constant 0 : i32
    return %c0_i32, %c0_i32_0 : i32, i32
  }
  func.func @transform_9(%arg0: i32) -> (i32, i32) {
    %c0_i32 = arith.constant 0 : i32
    %c0_i32_0 = arith.constant 0 : i32
    return %arg0, %c0_i32 : i32, i32
  }
}

</mosaic_0001>

<llo_original>
// kernel: tpu_custom_call.1
$region0: #{tpu_custom_call.1}
  #allocation0 [shape = 'u32[]', space=smem, size = 0x4, offset = 0x4, fixed_abs, tag = 'smem constant byte address 0x4 - core index']
  #allocation1 [shape = 'u32[144,128]{1,0:T(1,128)}', space=vmem, size = 0x12000, scoped, tag = 'internal scratch']
  %s0 = inlined_call_operand.vmem [shape: f32[32,10], index: 0, kind: input, shape index: {}]
  %s1 = inlined_call_operand.vmem [shape: f32[3,10,64], index: 1, kind: input, shape index: {}]
  %s2 = inlined_call_operand.vmem [shape: f32[1,64], index: 2, kind: input, shape index: {}]
  %s3 = inlined_call_operand.vmem [shape: f32[1,64], index: 3, kind: input, shape index: {}]
  %s4 = inlined_call_operand.vmem [shape: f32[1,64], index: 4, kind: input, shape index: {}]
  %s5 = inlined_call_operand.vmem [shape: f32[64,8], index: 5, kind: input, shape index: {}]
  %s6 = inlined_call_operand.vmem [shape: f32[8,64], index: 6, kind: input, shape index: {}]
  %s7 = inlined_call_operand.vmem [shape: f32[3,64,2], index: 7, kind: input, shape index: {}]
  %s8 = inlined_call_operand.vmem [shape: f32[1,2], index: 8, kind: input, shape index: {}]
  %s9 = inlined_call_operand.vmem [shape: f32[32,2], index: 9, kind: output, shape index: {}]
  %s10 = sld [smem:[#allocation0]]
  $region46: #{tpu_custom_call.1} parent=0
    _
  %s12 = ssub.s32 1, %s10
  %s13 = scalar_select 0, %s12, %s10
  // Predicated region
  $region2: #{tpu_custom_call.1} parent=0 // pred_check
    _
  $region3: #{tpu_custom_call.1} parent=0 // pred_check_branch
    %15 = sbr.rel (0) target = $region5
  $region4: #{tpu_custom_call.1} parent=0 // pred_region
    _
  $region5: #{tpu_custom_call.1} parent=0 // pred_fallthru
    _
  // Predicated region
  $region6: #{tpu_custom_call.1} parent=0 // pred_check
    _
  $region7: #{tpu_custom_call.1} parent=0 // pred_check_branch
    %17 = sbr.rel (0) target = $region9
  $region8: #{tpu_custom_call.1} parent=0 // pred_region
    _
  $region9: #{tpu_custom_call.1} parent=0 // pred_fallthru
    _
  // Predicated region
  $region10: #{tpu_custom_call.1} parent=0 // pred_check
    _
  $region11: #{tpu_custom_call.1} parent=0 // pred_check_branch
    %19 = sbr.rel (0) target = $region13
  $region12: #{tpu_custom_call.1} parent=0 // pred_region
    _
  $region13: #{tpu_custom_call.1} parent=0 // pred_fallthru
    _
  // Predicated region
  $region14: #{tpu_custom_call.1} parent=0 // pred_check
    _
  $region15: #{tpu_custom_call.1} parent=0 // pred_check_branch
    %21 = sbr.rel (0) target = $region17
  $region16: #{tpu_custom_call.1} parent=0 // pred_region
    _
  $region17: #{tpu_custom_call.1} parent=0 // pred_fallthru
    _
  // Predicated region
  $region18: #{tpu_custom_call.1} parent=0 // pred_check
    _
  $region19: #{tpu_custom_call.1} parent=0 // pred_check_branch
    %23 = sbr.rel (0) target = $region21
  $region20: #{tpu_custom_call.1} parent=0 // pred_region
    _
  $region21: #{tpu_custom_call.1} parent=0 // pred_fallthru
    _
  // Predicated region
  $region22: #{tpu_custom_call.1} parent=0 // pred_check
    _
  $region23: #{tpu_custom_call.1} parent=0 // pred_check_branch
    %25 = sbr.rel (0) target = $region25
  $region24: #{tpu_custom_call.1} parent=0 // pred_region
    _
  $region25: #{tpu_custom_call.1} parent=0 // pred_fallthru
    _
  // Predicated region
  $region26: #{tpu_custom_call.1} parent=0 // pred_check
    _
  $region27: #{tpu_custom_call.1} parent=0 // pred_check_branch
    %27 = sbr.rel (0) target = $region29
  $region28: #{tpu_custom_call.1} parent=0 // pred_region
    _
  $region29: #{tpu_custom_call.1} parent=0 // pred_fallthru
    _
  // Predicated region
  $region30: #{tpu_custom_call.1} parent=0 // pred_check
    _
  $region31: #{tpu_custom_call.1} parent=0 // pred_check_branch
    %29 = sbr.rel (0) target = $region33
  $region32: #{tpu_custom_call.1} parent=0 // pred_region
    _
  $region33: #{tpu_custom_call.1} parent=0 // pred_fallthru
    _
  // Predicated region
  $region34: #{tpu_custom_call.1} parent=0 // pred_check
    _
  $region35: #{tpu_custom_call.1} parent=0 // pred_check_branch
    %31 = sbr.rel (0) target = $region37
  $region36: #{tpu_custom_call.1} parent=0 // pred_region
    _
  $region37: #{tpu_custom_call.1} parent=0 // pred_fallthru
    _
  %v32 = vlaneseq
  %v33 = vshrl.u32 %v32, 7
  %v34 = vadd.s32 %v33, 8
  %v35 = vadd.s32 %v33, 16
  %v36 = vadd.s32 %v33, 24
  %vm37 = vcmp.lt.s32.totalorder %v33, 0
  %v38 = vsub.s32 0, %v33
  %v39 = vsel %vm37, %v38, %v33
  %v40 = vshrl.u32 %v39, 4
  %v41 = vand.u32 %v39, 15
  %v42 = vsub.s32 0, %v41
  %v43 = vsel %vm37, %v42, %v41
  %vm44 = vcmp.lt.s32.totalorder %v34, 0
  %v45 = vsub.s32 0, %v34
  %v46 = vsel %vm44, %v45, %v34
  %v47 = vshrl.u32 %v46, 4
  %v48 = vand.u32 %v46, 15
  %v49 = vsub.s32 0, %v48
  %v50 = vsel %vm44, %v49, %v48
  %vm51 = vcmp.lt.s32.totalorder %v35, 0
  %v52 = vsub.s32 0, %v35
  %v53 = vsel %vm51, %v52, %v35
  %v54 = vshrl.u32 %v53, 4
  %v55 = vand.u32 %v53, 15
  %v56 = vsub.s32 0, %v55
  %v57 = vsel %vm51, %v56, %v55
  %vm58 = vcmp.lt.s32.totalorder %v36, 0
  %v59 = vsub.s32 0, %v36
  %v60 = vsel %vm58, %v59, %v36
  %v61 = vshrl.u32 %v60, 4
  %v62 = vand.u32 %v60, 15
  %v63 = vsub.s32 0, %v62
  %v64 = vsel %vm58, %v63, %v62
  %vm65 = vcmp.ne.s32.totalorder %v43, 0
  %vm66 = vcmp.ne.s32.totalorder %v50, 0
  %vm67 = vcmp.ne.s32.totalorder %v57, 0
  %vm68 = vcmp.ne.s32.totalorder %v64, 0
  %vm69 = vcmp.lt.s32.totalorder %v43, 0
  %vm70 = vcmp.lt.s32.totalorder %v50, 0
  %vm71 = vcmp.lt.s32.totalorder %v57, 0
  %vm72 = vcmp.lt.s32.totalorder %v64, 0
  %vm73 = vmand %vm69, %vm65
  %vm74 = vmand %vm70, %vm66
  %vm75 = vmand %vm71, %vm67
  %vm76 = vmand %vm72, %vm68
  %v77 = vadd.s32 %v43, 16
  %v78 = vadd.s32 %v50, 16
  %v79 = vadd.s32 %v57, 16
  %v80 = vadd.s32 %v64, 16
  %v81 = vsel %vm73, %v77, %v43
  %v82 = vsel %vm74, %v78, %v50
  %v83 = vsel %vm75, %v79, %v57
  %v84 = vsel %vm76, %v80, %v64
  %v85 = vadd.s32 %v81, 4294967295
  %v86 = vadd.s32 %v82, 4294967295
  %v87 = vadd.s32 %v83, 4294967295
  %v88 = vadd.s32 %v84, 4294967295
  %vm89 = vcmp.ge.s32.totalorder %v85, 0
  %vm90 = vcmp.ge.s32.totalorder %v86, 0
  %vm91 = vcmp.ge.s32.totalorder %v87, 0
  %vm92 = vcmp.ge.s32.totalorder %v88, 0
  %vm93 = vcmp.le.s32.totalorder %v85, 15
  %vm94 = vcmp.le.s32.totalorder %v86, 15
  %vm95 = vcmp.le.s32.totalorder %v87, 15
  %vm96 = vcmp.le.s32.totalorder %v88, 15
  %vm97 = vmand %vm89, %vm93
  %vm98 = vmand %vm90, %vm94
  %vm99 = vmand %vm91, %vm95
  %vm100 = vmand %vm92, %vm96
  %v101 = vsel %vm97, 1, 0
  %v102 = vsel %vm98, 1, 0
  %v103 = vsel %vm99, 1, 0
  %v104 = vsel %vm100, 1, 0
  %v105 = vcvt.s32.f32 %v101
  %v106 = vcvt.s32.f32 %v102
  %v107 = vcvt.s32.f32 %v103
  %v108 = vcvt.s32.f32 %v104
  %v109 = vadd.s32 %v81, 1
  %v110 = vadd.s32 %v82, 1
  %v111 = vadd.s32 %v83, 1
  %v112 = vadd.s32 %v84, 1
  %vm113 = vcmp.ge.s32.totalorder %v109, 0
  %vm114 = vcmp.ge.s32.totalorder %v110, 0
  %vm115 = vcmp.ge.s32.totalorder %v111, 0
  %vm116 = vcmp.ge.s32.totalorder %v112, 0
  %vm117 = vcmp.le.s32.totalorder %v109, 15
  %vm118 = vcmp.le.s32.totalorder %v110, 15
  %vm119 = vcmp.le.s32.totalorder %v111, 15
  %vm120 = vcmp.le.s32.totalorder %v112, 15
  %vm121 = vmand %vm113, %vm117
  %vm122 = vmand %vm114, %vm118
  %vm123 = vmand %vm115, %vm119
  %vm124 = vmand %vm116, %vm120
  %v125 = vsel %vm121, 1, 0
  %v126 = vsel %vm122, 1, 0
  %v127 = vsel %vm123, 1, 0
  %v128 = vsel %vm124, 1, 0
  %v129 = vcvt.s32.f32 %v125
  %v130 = vcvt.s32.f32 %v126
  %v131 = vcvt.s32.f32 %v127
  %v132 = vcvt.s32.f32 %v128
  %v133 = vld [vmem:[%s0] sm:$0xff]
  %v134 = vld [vmem:[%s0 + $0x8] sm:$0xff]
  %v135 = vld [vmem:[%s0 + $0x10] sm:$0xff]
  %v136 = vld [vmem:[%s0 + $0x18] sm:$0xff]
  %v137 = vrot.slane %v133, 7
  %v138 = vrot.slane %v134, 7
  %v139 = vrot.slane %v135, 7
  %v140 = vrot.slane %v136, 7
  %vm141 = vcmp.lt.s32.totalorder %v33, 1
  %v142 = vsel %vm141, %v139, %v140
  %v143 = vsel %vm141, %v138, %v139
  %v144 = vsel %vm141, %v137, %v138
  %v145 = vsel %vm141, %v140, %v137
  %v146 = vmul.f32 %v145, %v105
  %v147 = vmul.f32 %v144, %v106
  %v148 = vmul.f32 %v143, %v107
  %v149 = vmul.f32 %v142, %v108
  %v150 = vld [vmem:[%s1] sm:$0xff]
  %v151 = vld [vmem:[%s1 + $0x8] sm:$0x3]
  %s152 = scalar_lea.vmem %s1, 16
  %v153 = vld [vmem:[%s152] sm:$0xff]
  %v154 = vld [vmem:[%s152 + $0x8] sm:$0x3]
  %vm155 = vcmask 80896
  %v157 = vsel %vm155, %v133, 0
  %v160 = vsel %vm155, %v134, 0
  %v163 = vsel %vm155, %v135, 0
  %v166 = vsel %vm155, %v136, 0
  %vm168 = vcmask 1041408
  %v170 = vsel %vm168, %v154, 0
  %172 = vmatprep.subr.mxu0 0.0
  %173 = vmatpush1.msra.mxu0 %v153
  %174 = vmatprep.subr.mxu0 0.0
  %175 = vmatpush1.msra.mxu0 %v170
  %176 = vmatprep.subr.mxu0 0.0
  %177 = vmatpush1.msra.mxu0 0.0
  %178 = vmatprep.subr.mxu0 0.0
  %179 = vmatpush1.msra.mxu0 0.0
  %180 = vmatprep.subr.mxu0 0.0
  %181 = vmatpush1.msra.mxu0 0.0
  %182 = vmatprep.subr.mxu0 0.0
  %183 = vmatpush1.msra.mxu0 0.0
  %184 = vmatprep.subr.mxu0 0.0
  %185 = vmatpush1.msra.mxu0 0.0
  %186 = vmatprep.subr.mxu0 0.0
  %187 = vmatpush1.msra.mxu0 0.0
  %188 = vmatprep.subr.mxu0 0.0
  %189 = vmatpush1.msra.mxu0 0.0
  %190 = vmatprep.subr.mxu0 0.0
  %191 = vmatpush1.msra.mxu0 0.0
  %192 = vmatprep.subr.mxu0 0.0
  %193 = vmatpush1.msra.mxu0 0.0
  %194 = vmatprep.subr.mxu0 0.0
  %195 = vmatpush1.msra.mxu0 0.0
  %196 = vmatprep.subr.mxu0 0.0
  %197 = vmatpush1.msra.mxu0 0.0
  %198 = vmatprep.subr.mxu0 0.0
  %199 = vmatpush1.msra.mxu0 0.0
  %200 = vmatprep.subr.mxu0 0.0
  %201 = vmatpush1.msra.mxu0 0.0
  %202 = vmatprep.subr.mxu0 0.0
  %203 = vmatpush1.msra.mxu0 0.0
  %204 = vmatprep.subr.mxu0 0.0
  %205 = vmatpush1.msra.mxu0 0.0
  %206 = vmatprep.subr.mxu0 0.0
  %207 = vmatpush1.msra.mxu0 0.0
  %208 = vmatprep.subr.mxu0 0.0
  %209 = vmatpush1.msra.mxu0 0.0
  %210 = vmatprep.subr.mxu0 0.0
  %211 = vmatpush1.msra.mxu0 0.0
  %212 = vmatprep.subr.mxu0 0.0
  %213 = vmatpush1.msra.mxu0 0.0
  %214 = vmatprep.subr.mxu0 0.0
  %215 = vmatpush1.msra.mxu0 0.0
  %216 = vmatprep.subr.mxu0 0.0
  %217 = vmatpush1.msra.mxu0 0.0
  %218 = vmatprep.subr.mxu0 0.0
  %219 = vmatpush1.msra.mxu0 0.0
  %220 = vmatprep.subr.mxu0 0.0
  %221 = vmatpush1.msra.mxu0 0.0
  %222 = vmatprep.subr.mxu0 0.0
  %223 = vmatpush1.msra.mxu0 0.0
  %224 = vmatprep.subr.mxu0 0.0
  %225 = vmatpush1.msra.mxu0 0.0
  %226 = vmatprep.subr.mxu0 0.0
  %227 = vmatpush1.msra.mxu0 0.0
  %228 = vmatprep.subr.mxu0 0.0
  %229 = vmatpush1.msra.mxu0 0.0
  %230 = vmatprep.subr.mxu0 0.0
  %231 = vmatpush1.msra.mxu0 0.0
  %232 = vmatprep.subr.mxu0 0.0
  %233 = vmatpush1.msra.mxu0 0.0
  %234 = vmatprep.subr.mxu0 0.0
  %235 = vmatpush1.msra.mxu0 0.0
  %236 = vmatprep.mubr.f32.mxu0 0.0
  %237 = vmatmul.mubr.f32.gmra.mrb[0].mxu0 %v157
  %v238 = vpop.f32.mrb[0].mxu0
  %v239 = vadd.f32 0.0, %v238
  %v240 = vpop.f32.mrb[0].mxu0
  %241 = vmatprep.mubr.f32.mxu0 0.0
  %242 = vmatmul.mubr.f32.gmra.mrb[0].mxu0 %v160
  %v243 = vpop.f32.mrb[0].mxu0
  %v244 = vadd.f32 0.0, %v243
  %v245 = vpop.f32.mrb[0].mxu0
  %246 = vmatprep.mubr.f32.mxu0 0.0
  %247 = vmatmul.mubr.f32.gmra.mrb[0].mxu0 %v163
  %v248 = vpop.f32.mrb[0].mxu0
  %v249 = vadd.f32 0.0, %v248
  %v250 = vpop.f32.mrb[0].mxu0
  %251 = vmatprep.mubr.f32.mxu0 0.0
  %252 = vmatmul.mubr.f32.gmra.mrb[0].mxu0 %v166
  %v253 = vpop.f32.mrb[0].mxu0
  %v254 = vadd.f32 0.0, %v253
  %v255 = vpop.f32.mrb[0].mxu0
  %256 = vdwg.mxu0
  %v258 = vsel %vm155, %v146, 0
  %v261 = vsel %vm155, %v147, 0
  %v264 = vsel %vm155, %v148, 0
  %v267 = vsel %vm155, %v149, 0
  %v270 = vsel %vm168, %v151, 0
  %272 = vmatprep.subr.mxu0 0.0
  %273 = vmatpush1.msra.mxu0 %v150
  %274 = vmatprep.subr.mxu0 0.0
  %275 = vmatpush1.msra.mxu0 %v270
  %276 = vmatprep.subr.mxu0 0.0
  %277 = vmatpush1.msra.mxu0 0.0
  %278 = vmatprep.subr.mxu0 0.0
  %279 = vmatpush1.msra.mxu0 0.0
  %280 = vmatprep.subr.mxu0 0.0
  %281 = vmatpush1.msra.mxu0 0.0
  %282 = vmatprep.subr.mxu0 0.0
  %283 = vmatpush1.msra.mxu0 0.0
  %284 = vmatprep.subr.mxu0 0.0
  %285 = vmatpush1.msra.mxu0 0.0
  %286 = vmatprep.subr.mxu0 0.0
  %287 = vmatpush1.msra.mxu0 0.0
  %288 = vmatprep.subr.mxu0 0.0
  %289 = vmatpush1.msra.mxu0 0.0
  %290 = vmatprep.subr.mxu0 0.0
  %291 = vmatpush1.msra.mxu0 0.0
  %292 = vmatprep.subr.mxu0 0.0
  %293 = vmatpush1.msra.mxu0 0.0
  %294 = vmatprep.subr.mxu0 0.0
  %295 = vmatpush1.msra.mxu0 0.0
  %296 = vmatprep.subr.mxu0 0.0
  %297 = vmatpush1.msra.mxu0 0.0
  %298 = vmatprep.subr.mxu0 0.0
  %299 = vmatpush1.msra.mxu0 0.0
  %300 = vmatprep.subr.mxu0 0.0
  %301 = vmatpush1.msra.mxu0 0.0
  %302 = vmatprep.subr.mxu0 0.0
  %303 = vmatpush1.msra.mxu0 0.0
  %304 = vmatprep.subr.mxu0 0.0
  %305 = vmatpush1.msra.mxu0 0.0
  %306 = vmatprep.subr.mxu0 0.0
  %307 = vmatpush1.msra.mxu0 0.0
  %308 = vmatprep.subr.mxu0 0.0
  %309 = vmatpush1.msra.mxu0 0.0
  %310 = vmatprep.subr.mxu0 0.0
  %311 = vmatpush1.msra.mxu0 0.0
  %312 = vmatprep.subr.mxu0 0.0
  %313 = vmatpush1.msra.mxu0 0.0
  %314 = vmatprep.subr.mxu0 0.0
  %315 = vmatpush1.msra.mxu0 0.0
  %316 = vmatprep.subr.mxu0 0.0
  %317 = vmatpush1.msra.mxu0 0.0
  %318 = vmatprep.subr.mxu0 0.0
  %319 = vmatpush1.msra.mxu0 0.0
  %320 = vmatprep.subr.mxu0 0.0
  %321 = vmatpush1.msra.mxu0 0.0
  %322 = vmatprep.subr.mxu0 0.0
  %323 = vmatpush1.msra.mxu0 0.0
  %324 = vmatprep.subr.mxu0 0.0
  %325 = vmatpush1.msra.mxu0 0.0
  %326 = vmatprep.subr.mxu0 0.0
  %327 = vmatpush1.msra.mxu0 0.0
  %328 = vmatprep.subr.mxu0 0.0
  %329 = vmatpush1.msra.mxu0 0.0
  %330 = vmatprep.subr.mxu0 0.0
  %331 = vmatpush1.msra.mxu0 0.0
  %332 = vmatprep.subr.mxu0 0.0
  %333 = vmatpush1.msra.mxu0 0.0
  %334 = vmatprep.subr.mxu0 0.0
  %335 = vmatpush1.msra.mxu0 0.0
  %336 = vmatprep.mubr.f32.mxu0 0.0
  %337 = vmatmul.mubr.f32.gmra.mrb[0].mxu0 %v258
  %v338 = vpop.f32.mrb[0].mxu0
  %v339 = vadd.f32 %v239, %v338
  %v340 = vpop.f32.mrb[0].mxu0
  %341 = vmatprep.mubr.f32.mxu0 0.0
  %342 = vmatmul.mubr.f32.gmra.mrb[0].mxu0 %v261
  %v343 = vpop.f32.mrb[0].mxu0
  %v344 = vadd.f32 %v244, %v343
  %v345 = vpop.f32.mrb[0].mxu0
  %346 = vmatprep.mubr.f32.mxu0 0.0
  %347 = vmatmul.mubr.f32.gmra.mrb[0].mxu0 %v264
  %v348 = vpop.f32.mrb[0].mxu0
  %v349 = vadd.f32 %v249, %v348
  %v350 = vpop.f32.mrb[0].mxu0
  %351 = vmatprep.mubr.f32.mxu0 0.0
  %352 = vmatmul.mubr.f32.gmra.mrb[0].mxu0 %v267
  %v353 = vpop.f32.mrb[0].mxu0
  %v354 = vadd.f32 %v254, %v353
  %v355 = vpop.f32.mrb[0].mxu0
  %356 = vdwg.mxu0
  %v357 = vrot.slane %v133, 1
  %v358 = vrot.slane %v134, 1
  %v359 = vrot.slane %v135, 1
  %v360 = vrot.slane %v136, 1
  %vm361 = vcmp.lt.s32.totalorder %v33, 7
  %v362 = vsel %vm361, %v359, %v360
  %v363 = vsel %vm361, %v358, %v359
  %v364 = vsel %vm361, %v357, %v358
  %v365 = vsel %vm361, %v360, %v357
  %v366 = vmul.f32 %v364, %v129
  %v367 = vmul.f32 %v363, %v130
  %v368 = vmul.f32 %v362, %v131
  %v369 = vmul.f32 %v365, %v132
  %s370 = scalar_lea.vmem %s1, 32
  %v371 = vld [vmem:[%s370] sm:$0xff]
  %v372 = vld [vmem:[%s370 + $0x8] sm:$0x3]
  %v374 = vsel %vm155, %v366, 0
  %v377 = vsel %vm155, %v367, 0
  %v380 = vsel %vm155, %v368, 0
  %v383 = vsel %vm155, %v369, 0
  %v386 = vsel %vm168, %v372, 0
  %388 = vmatprep.subr.mxu0 0.0
  %389 = vmatpush1.msra.mxu0 %v371
  %390 = vmatprep.subr.mxu0 0.0
  %391 = vmatpush1.msra.mxu0 %v386
  %392 = vmatprep.subr.mxu0 0.0
  %393 = vmatpush1.msra.mxu0 0.0
  %394 = vmatprep.subr.mxu0 0.0
  %395 = vmatpush1.msra.mxu0 0.0
  %396 = vmatprep.subr.mxu0 0.0
  %397 = vmatpush1.msra.mxu0 0.0
  %398 = vmatprep.subr.mxu0 0.0
  %399 = vmatpush1.msra.mxu0 0.0
  %400 = vmatprep.subr.mxu0 0.0
  %401 = vmatpush1.msra.mxu0 0.0
  %402 = vmatprep.subr.mxu0 0.0
  %403 = vmatpush1.msra.mxu0 0.0
  %404 = vmatprep.subr.mxu0 0.0
  %405 = vmatpush1.msra.mxu0 0.0
  %406 = vmatprep.subr.mxu0 0.0
  %407 = vmatpush1.msra.mxu0 0.0
  %408 = vmatprep.subr.mxu0 0.0
  %409 = vmatpush1.msra.mxu0 0.0
  %410 = vmatprep.subr.mxu0 0.0
  %411 = vmatpush1.msra.mxu0 0.0
  %412 = vmatprep.subr.mxu0 0.0
  %413 = vmatpush1.msra.mxu0 0.0
  %414 = vmatprep.subr.mxu0 0.0
  %415 = vmatpush1.msra.mxu0 0.0
  %416 = vmatprep.subr.mxu0 0.0
  %417 = vmatpush1.msra.mxu0 0.0
  %418 = vmatprep.subr.mxu0 0.0
  %419 = vmatpush1.msra.mxu0 0.0
  %420 = vmatprep.subr.mxu0 0.0
  %421 = vmatpush1.msra.mxu0 0.0
  %422 = vmatprep.subr.mxu0 0.0
  %423 = vmatpush1.msra.mxu0 0.0
  %424 = vmatprep.subr.mxu0 0.0
  %425 = vmatpush1.msra.mxu0 0.0
  %426 = vmatprep.subr.mxu0 0.0
  %427 = vmatpush1.msra.mxu0 0.0
  %428 = vmatprep.subr.mxu0 0.0
  %429 = vmatpush1.msra.mxu0 0.0
  %430 = vmatprep.subr.mxu0 0.0
  %431 = vmatpush1.msra.mxu0 0.0
  %432 = vmatprep.subr.mxu0 0.0
  %433 = vmatpush1.msra.mxu0 0.0
  %434 = vmatprep.subr.mxu0 0.0
  %435 = vmatpush1.msra.mxu0 0.0
  %436 = vmatprep.subr.mxu0 0.0
  %437 = vmatpush1.msra.mxu0 0.0
  %438 = vmatprep.subr.mxu0 0.0
  %439 = vmatpush1.msra.mxu0 0.0
  %440 = vmatprep.subr.mxu0 0.0
  %441 = vmatpush1.msra.mxu0 0.0
  %442 = vmatprep.subr.mxu0 0.0
  %443 = vmatpush1.msra.mxu0 0.0
  %444 = vmatprep.subr.mxu0 0.0
  %445 = vmatpush1.msra.mxu0 0.0
  %446 = vmatprep.subr.mxu0 0.0
  %447 = vmatpush1.msra.mxu0 0.0
  %448 = vmatprep.subr.mxu0 0.0
  %449 = vmatpush1.msra.mxu0 0.0
  %450 = vmatprep.subr.mxu0 0.0
  %451 = vmatpush1.msra.mxu0 0.0
  %452 = vmatprep.mubr.f32.mxu0 0.0
  %453 = vmatmul.mubr.f32.gmra.mrb[0].mxu0 %v374
  %v454 = vpop.f32.mrb[0].mxu0
  %v455 = vadd.f32 0.0, %v454
  %v456 = vpop.f32.mrb[0].mxu0
  %457 = vmatprep.mubr.f32.mxu0 0.0
  %458 = vmatmul.mubr.f32.gmra.mrb[0].mxu0 %v377
  %v459 = vpop.f32.mrb[0].mxu0
  %v460 = vadd.f32 0.0, %v459
  %v461 = vpop.f32.mrb[0].mxu0
  %462 = vmatprep.mubr.f32.mxu0 0.0
  %463 = vmatmul.mubr.f32.gmra.mrb[0].mxu0 %v380
  %v464 = vpop.f32.mrb[0].mxu0
  %v465 = vadd.f32 0.0, %v464
  %v466 = vpop.f32.mrb[0].mxu0
  %467 = vmatprep.mubr.f32.mxu0 0.0
  %468 = vmatmul.mubr.f32.gmra.mrb[0].mxu0 %v383
  %v469 = vpop.f32.mrb[0].mxu0
  %v470 = vadd.f32 0.0, %v469
  %v471 = vpop.f32.mrb[0].mxu0
  %472 = vdwg.mxu0
  %v473 = vadd.f32 %v339, %v455
  %v474 = vadd.f32 %v344, %v460
  %v475 = vadd.f32 %v349, %v465
  %v476 = vadd.f32 %v354, %v470
  %v477 = vld [vmem:[%s2] sm:$0x1]
  %v479 = vlaneseq
  %v480 = vshrl.u32 %v479, 7
  %v481 = vsub.s32 0, %v480
  %v482 = vrot.slane %v477, %v481
  %v484 = vadd.f32 %v473, %v482
  %v485 = vadd.f32 %v474, %v482
  %v486 = vadd.f32 %v475, %v482
  %v487 = vadd.f32 %v476, %v482
  %vm488 = vcmask 523264
  %v489 = vsel %vm488, %v484, 0.0
  %v490 = vsel %vm488, %v485, 0.0
  %v491 = vadd.f32 %v489, %v490
  %v492 = vrot.slane %v491, 4
  %v493 = vadd.f32 %v491, %v492
  %v494 = vrot.slane %v493, 2
  %v495 = vadd.f32 %v493, %v494
  %v496 = vrot.slane %v495, 1
  %v497 = vadd.f32 %v495, %v496
  %v498 = vsel %vm488, %v486, 0.0
  %v499 = vsel %vm488, %v487, 0.0
  %v500 = vadd.f32 %v498, %v499
  %v501 = vrot.slane %v500, 4
  %v502 = vadd.f32 %v500, %v501
  %v503 = vrot.slane %v502, 2
  %v504 = vadd.f32 %v502, %v503
  %v505 = vrot.slane %v504, 1
  %v506 = vadd.f32 %v504, %v505
  %v507 = vmul.f32 %v484, %v484
  %v508 = vmul.f32 %v485, %v485
  %v509 = vmul.f32 %v486, %v486
  %v510 = vmul.f32 %v487, %v487
  %v511 = vsel %vm488, %v507, 0.0
  %v512 = vsel %vm488, %v508, 0.0
  %v513 = vadd.f32 %v511, %v512
  %v514 = vrot.slane %v513, 4
  %v515 = vadd.f32 %v513, %v514
  %v516 = vrot.slane %v515, 2
  %v517 = vadd.f32 %v515, %v516
  %v518 = vrot.slane %v517, 1
  %v519 = vadd.f32 %v517, %v518
  %v520 = vsel %vm488, %v509, 0.0
  %v521 = vsel %vm488, %v510, 0.0
  %v522 = vadd.f32 %v520, %v521
  %v523 = vrot.slane %v522, 4
  %v524 = vadd.f32 %v522, %v523
  %v525 = vrot.slane %v524, 2
  %v526 = vadd.f32 %v524, %v525
  %v527 = vrot.slane %v526, 1
  %v528 = vadd.f32 %v526, %v527
  %v529 = vld [vmem:[%s5] sm:$0xff]
  %v530 = vld [vmem:[%s5 + $0x8] sm:$0xff]
  %v531 = vld [vmem:[%s5 + $0x10] sm:$0xff]
  %v532 = vld [vmem:[%s5 + $0x18] sm:$0xff]
  %v533 = vld [vmem:[%s5 + $0x20] sm:$0xff]
  %v534 = vld [vmem:[%s5 + $0x28] sm:$0xff]
  %v535 = vld [vmem:[%s5 + $0x30] sm:$0xff]
  %v536 = vld [vmem:[%s5 + $0x38] sm:$0xff]
  %vm539 = vcmask 1041409
  %v540 = vsel %vm539, %v506, %v497
  %v541 = vsel %vm488, %v540, 0
  %543 = vmatprep.subr.mxu0 0.0
  %544 = vmatpush1.msra.mxu0 %v529
  %545 = vmatprep.subr.mxu0 0.0
  %546 = vmatpush1.msra.mxu0 %v530
  %547 = vmatprep.subr.mxu0 0.0
  %548 = vmatpush1.msra.mxu0 %v531
  %549 = vmatprep.subr.mxu0 0.0
  %550 = vmatpush1.msra.mxu0 %v532
  %551 = vmatprep.subr.mxu0 0.0
  %552 = vmatpush1.msra.mxu0 %v533
  %553 = vmatprep.subr.mxu0 0.0
  %554 = vmatpush1.msra.mxu0 %v534
  %555 = vmatprep.subr.mxu0 0.0
  %556 = vmatpush1.msra.mxu0 %v535
  %557 = vmatprep.subr.mxu0 0.0
  %558 = vmatpush1.msra.mxu0 %v536
  %559 = vmatprep.subr.mxu0 0.0
  %560 = vmatpush1.msra.mxu0 0.0
  %561 = vmatprep.subr.mxu0 0.0
  %562 = vmatpush1.msra.mxu0 0.0
  %563 = vmatprep.subr.mxu0 0.0
  %564 = vmatpush1.msra.mxu0 0.0
  %565 = vmatprep.subr.mxu0 0.0
  %566 = vmatpush1.msra.mxu0 0.0
  %567 = vmatprep.subr.mxu0 0.0
  %568 = vmatpush1.msra.mxu0 0.0
  %569 = vmatprep.subr.mxu0 0.0
  %570 = vmatpush1.msra.mxu0 0.0
  %571 = vmatprep.subr.mxu0 0.0
  %572 = vmatpush1.msra.mxu0 0.0
  %573 = vmatprep.subr.mxu0 0.0
  %574 = vmatpush1.msra.mxu0 0.0
  %575 = vmatprep.subr.mxu0 0.0
  %576 = vmatpush1.msra.mxu0 0.0
  %577 = vmatprep.subr.mxu0 0.0
  %578 = vmatpush1.msra.mxu0 0.0
  %579 = vmatprep.subr.mxu0 0.0
  %580 = vmatpush1.msra.mxu0 0.0
  %581 = vmatprep.subr.mxu0 0.0
  %582 = vmatpush1.msra.mxu0 0.0
  %583 = vmatprep.subr.mxu0 0.0
  %584 = vmatpush1.msra.mxu0 0.0
  %585 = vmatprep.subr.mxu0 0.0
  %586 = vmatpush1.msra.mxu0 0.0
  %587 = vmatprep.subr.mxu0 0.0
  %588 = vmatpush1.msra.mxu0 0.0
  %589 = vmatprep.subr.mxu0 0.0
  %590 = vmatpush1.msra.mxu0 0.0
  %591 = vmatprep.subr.mxu0 0.0
  %592 = vmatpush1.msra.mxu0 0.0
  %593 = vmatprep.subr.mxu0 0.0
  %594 = vmatpush1.msra.mxu0 0.0
  %595 = vmatprep.subr.mxu0 0.0
  %596 = vmatpush1.msra.mxu0 0.0
  %597 = vmatprep.subr.mxu0 0.0
  %598 = vmatpush1.msra.mxu0 0.0
  %599 = vmatprep.subr.mxu0 0.0
  %600 = vmatpush1.msra.mxu0 0.0
  %601 = vmatprep.subr.mxu0 0.0
  %602 = vmatpush1.msra.mxu0 0.0
  %603 = vmatprep.subr.mxu0 0.0
  %604 = vmatpush1.msra.mxu0 0.0
  %605 = vmatprep.subr.mxu0 0.0
  %606 = vmatpush1.msra.mxu0 0.0
  %607 = vmatprep.mubr.f32.mxu0 0.0
  %608 = vmatmul.mubr.f32.gmra.mrb[0].mxu0 %v541
  %v609 = vpop.f32.mrb[0].mxu0
  %v610 = vadd.f32 0.0, %v609
  %v611 = vpop.f32.mrb[0].mxu0
  %612 = vdwg.mxu0
  %v615 = vsel %vm539, %v528, %v519
  %v616 = vsel %vm488, %v615, 0
  %618 = vmatprep.subr.mxu0 0.0
  %619 = vmatpush1.msra.mxu0 %v529
  %620 = vmatprep.subr.mxu0 0.0
  %621 = vmatpush1.msra.mxu0 %v530
  %622 = vmatprep.subr.mxu0 0.0
  %623 = vmatpush1.msra.mxu0 %v531
  %624 = vmatprep.subr.mxu0 0.0
  %625 = vmatpush1.msra.mxu0 %v532
  %626 = vmatprep.subr.mxu0 0.0
  %627 = vmatpush1.msra.mxu0 %v533
  %628 = vmatprep.subr.mxu0 0.0
  %629 = vmatpush1.msra.mxu0 %v534
  %630 = vmatprep.subr.mxu0 0.0
  %631 = vmatpush1.msra.mxu0 %v535
  %632 = vmatprep.subr.mxu0 0.0
  %633 = vmatpush1.msra.mxu0 %v536
  %634 = vmatprep.subr.mxu0 0.0
  %635 = vmatpush1.msra.mxu0 0.0
  %636 = vmatprep.subr.mxu0 0.0
  %637 = vmatpush1.msra.mxu0 0.0
  %638 = vmatprep.subr.mxu0 0.0
  %639 = vmatpush1.msra.mxu0 0.0
  %640 = vmatprep.subr.mxu0 0.0
  %641 = vmatpush1.msra.mxu0 0.0
  %642 = vmatprep.subr.mxu0 0.0
  %643 = vmatpush1.msra.mxu0 0.0
  %644 = vmatprep.subr.mxu0 0.0
  %645 = vmatpush1.msra.mxu0 0.0
  %646 = vmatprep.subr.mxu0 0.0
  %647 = vmatpush1.msra.mxu0 0.0
  %648 = vmatprep.subr.mxu0 0.0
  %649 = vmatpush1.msra.mxu0 0.0
  %650 = vmatprep.subr.mxu0 0.0
  %651 = vmatpush1.msra.mxu0 0.0
  %652 = vmatprep.subr.mxu0 0.0
  %653 = vmatpush1.msra.mxu0 0.0
  %654 = vmatprep.subr.mxu0 0.0
  %655 = vmatpush1.msra.mxu0 0.0
  %656 = vmatprep.subr.mxu0 0.0
  %657 = vmatpush1.msra.mxu0 0.0
  %658 = vmatprep.subr.mxu0 0.0
  %659 = vmatpush1.msra.mxu0 0.0
  %660 = vmatprep.subr.mxu0 0.0
  %661 = vmatpush1.msra.mxu0 0.0
  %662 = vmatprep.subr.mxu0 0.0
  %663 = vmatpush1.msra.mxu0 0.0
  %664 = vmatprep.subr.mxu0 0.0
  %665 = vmatpush1.msra.mxu0 0.0
  %666 = vmatprep.subr.mxu0 0.0
  %667 = vmatpush1.msra.mxu0 0.0
  %668 = vmatprep.subr.mxu0 0.0
  %669 = vmatpush1.msra.mxu0 0.0
  %670 = vmatprep.subr.mxu0 0.0
  %671 = vmatpush1.msra.mxu0 0.0
  %672 = vmatprep.subr.mxu0 0.0
  %673 = vmatpush1.msra.mxu0 0.0
  %674 = vmatprep.subr.mxu0 0.0
  %675 = vmatpush1.msra.mxu0 0.0
  %676 = vmatprep.subr.mxu0 0.0
  %677 = vmatpush1.msra.mxu0 0.0
  %678 = vmatprep.subr.mxu0 0.0
  %679 = vmatpush1.msra.mxu0 0.0
  %680 = vmatprep.subr.mxu0 0.0
  %681 = vmatpush1.msra.mxu0 0.0
  %682 = vmatprep.mubr.f32.mxu0 0.0
  %683 = vmatmul.mubr.f32.gmra.mrb[0].mxu0 %v616
  %v684 = vpop.f32.mrb[0].mxu0
  %v685 = vadd.f32 0.0, %v684
  %v686 = vpop.f32.mrb[0].mxu0
  %687 = vdwg.mxu0
  %v688 = vmul.f32 %v610, 0.0078125
  %v689 = vmul.f32 %v685, 0.0078125
  %v690 = vmul.f32 %v688, %v688
  %v691 = vsub.f32 %v689, %v690
  %v692 = vadd.f32 %v691, 1e-05
  %v693 = vrsqrt.pop %v692
  %v694 = vld [vmem:[%s6] sm:$0xff]
  %vm695 = vcmask 64512
  %v697 = vsel %vm695, %v688, 0
  %699 = vmatprep.subr.mxu0 0.0
  %700 = vmatpush1.msra.mxu0 %v694
  %701 = vmatprep.subr.mxu0 0.0
  %702 = vmatpush1.msra.mxu0 0.0
  %703 = vmatprep.subr.mxu0 0.0
  %704 = vmatpush1.msra.mxu0 0.0
  %705 = vmatprep.subr.mxu0 0.0
  %706 = vmatpush1.msra.mxu0 0.0
  %707 = vmatprep.subr.mxu0 0.0
  %708 = vmatpush1.msra.mxu0 0.0
  %709 = vmatprep.subr.mxu0 0.0
  %710 = vmatpush1.msra.mxu0 0.0
  %711 = vmatprep.subr.mxu0 0.0
  %712 = vmatpush1.msra.mxu0 0.0
  %713 = vmatprep.subr.mxu0 0.0
  %714 = vmatpush1.msra.mxu0 0.0
  %715 = vmatprep.subr.mxu0 0.0
  %716 = vmatpush1.msra.mxu0 0.0
  %717 = vmatprep.subr.mxu0 0.0
  %718 = vmatpush1.msra.mxu0 0.0
  %719 = vmatprep.subr.mxu0 0.0
  %720 = vmatpush1.msra.mxu0 0.0
  %721 = vmatprep.subr.mxu0 0.0
  %722 = vmatpush1.msra.mxu0 0.0
  %723 = vmatprep.subr.mxu0 0.0
  %724 = vmatpush1.msra.mxu0 0.0
  %725 = vmatprep.subr.mxu0 0.0
  %726 = vmatpush1.msra.mxu0 0.0
  %727 = vmatprep.subr.mxu0 0.0
  %728 = vmatpush1.msra.mxu0 0.0
  %729 = vmatprep.subr.mxu0 0.0
  %730 = vmatpush1.msra.mxu0 0.0
  %731 = vmatprep.subr.mxu0 0.0
  %732 = vmatpush1.msra.mxu0 0.0
  %733 = vmatprep.subr.mxu0 0.0
  %734 = vmatpush1.msra.mxu0 0.0
  %735 = vmatprep.subr.mxu0 0.0
  %736 = vmatpush1.msra.mxu0 0.0
  %737 = vmatprep.subr.mxu0 0.0
  %738 = vmatpush1.msra.mxu0 0.0
  %739 = vmatprep.subr.mxu0 0.0
  %740 = vmatpush1.msra.mxu0 0.0
  %741 = vmatprep.subr.mxu0 0.0
  %742 = vmatpush1.msra.mxu0 0.0
  %743 = vmatprep.subr.mxu0 0.0
  %744 = vmatpush1.msra.mxu0 0.0
  %745 = vmatprep.subr.mxu0 0.0
  %746 = vmatpush1.msra.mxu0 0.0
  %747 = vmatprep.subr.mxu0 0.0
  %748 = vmatpush1.msra.mxu0 0.0
  %749 = vmatprep.subr.mxu0 0.0
  %750 = vmatpush1.msra.mxu0 0.0
  %751 = vmatprep.subr.mxu0 0.0
  %752 = vmatpush1.msra.mxu0 0.0
  %753 = vmatprep.subr.mxu0 0.0
  %754 = vmatpush1.msra.mxu0 0.0
  %755 = vmatprep.subr.mxu0 0.0
  %756 = vmatpush1.msra.mxu0 0.0
  %757 = vmatprep.subr.mxu0 0.0
  %758 = vmatpush1.msra.mxu0 0.0
  %759 = vmatprep.subr.mxu0 0.0
  %760 = vmatpush1.msra.mxu0 0.0
  %761 = vmatprep.subr.mxu0 0.0
  %762 = vmatpush1.msra.mxu0 0.0
  %763 = vmatprep.mubr.f32.mxu0 0.0
  %764 = vmatmul.mubr.f32.gmra.mrb[0].mxu0 %v697
  %v765 = vpop.f32.mrb[0].mxu0
  %v766 = vadd.f32 0.0, %v765
  %v767 = vpop.f32.mrb[0].mxu0
  %768 = vdwg.mxu0
  %v770 = vsel %vm695, %v693, 0
  %772 = vmatprep.subr.mxu0 0.0
  %773 = vmatpush1.msra.mxu0 %v694
  %774 = vmatprep.subr.mxu0 0.0
  %775 = vmatpush1.msra.mxu0 0.0
  %776 = vmatprep.subr.mxu0 0.0
  %777 = vmatpush1.msra.mxu0 0.0
  %778 = vmatprep.subr.mxu0 0.0
  %779 = vmatpush1.msra.mxu0 0.0
  %780 = vmatprep.subr.mxu0 0.0
  %781 = vmatpush1.msra.mxu0 0.0
  %782 = vmatprep.subr.mxu0 0.0
  %783 = vmatpush1.msra.mxu0 0.0
  %784 = vmatprep.subr.mxu0 0.0
  %785 = vmatpush1.msra.mxu0 0.0
  %786 = vmatprep.subr.mxu0 0.0
  %787 = vmatpush1.msra.mxu0 0.0
  %788 = vmatprep.subr.mxu0 0.0
  %789 = vmatpush1.msra.mxu0 0.0
  %790 = vmatprep.subr.mxu0 0.0
  %791 = vmatpush1.msra.mxu0 0.0
  %792 = vmatprep.subr.mxu0 0.0
  %793 = vmatpush1.msra.mxu0 0.0
  %794 = vmatprep.subr.mxu0 0.0
  %795 = vmatpush1.msra.mxu0 0.0
  %796 = vmatprep.subr.mxu0 0.0
  %797 = vmatpush1.msra.mxu0 0.0
  %798 = vmatprep.subr.mxu0 0.0
  %799 = vmatpush1.msra.mxu0 0.0
  %800 = vmatprep.subr.mxu0 0.0
  %801 = vmatpush1.msra.mxu0 0.0
  %802 = vmatprep.subr.mxu0 0.0
  %803 = vmatpush1.msra.mxu0 0.0
  %804 = vmatprep.subr.mxu0 0.0
  %805 = vmatpush1.msra.mxu0 0.0
  %806 = vmatprep.subr.mxu0 0.0
  %807 = vmatpush1.msra.mxu0 0.0
  %808 = vmatprep.subr.mxu0 0.0
  %809 = vmatpush1.msra.mxu0 0.0
  %810 = vmatprep.subr.mxu0 0.0
  %811 = vmatpush1.msra.mxu0 0.0
  %812 = vmatprep.subr.mxu0 0.0
  %813 = vmatpush1.msra.mxu0 0.0
  %814 = vmatprep.subr.mxu0 0.0
  %815 = vmatpush1.msra.mxu0 0.0
  %816 = vmatprep.subr.mxu0 0.0
  %817 = vmatpush1.msra.mxu0 0.0
  %818 = vmatprep.subr.mxu0 0.0
  %819 = vmatpush1.msra.mxu0 0.0
  %820 = vmatprep.subr.mxu0 0.0
  %821 = vmatpush1.msra.mxu0 0.0
  %822 = vmatprep.subr.mxu0 0.0
  %823 = vmatpush1.msra.mxu0 0.0
  %824 = vmatprep.subr.mxu0 0.0
  %825 = vmatpush1.msra.mxu0 0.0
  %826 = vmatprep.subr.mxu0 0.0
  %827 = vmatpush1.msra.mxu0 0.0
  %828 = vmatprep.subr.mxu0 0.0
  %829 = vmatpush1.msra.mxu0 0.0
  %830 = vmatprep.subr.mxu0 0.0
  %831 = vmatpush1.msra.mxu0 0.0
  %832 = vmatprep.subr.mxu0 0.0
  %833 = vmatpush1.msra.mxu0 0.0
  %834 = vmatprep.subr.mxu0 0.0
  %835 = vmatpush1.msra.mxu0 0.0
  %836 = vmatprep.mubr.f32.mxu0 0.0
  %837 = vmatmul.mubr.f32.gmra.mrb[0].mxu0 %v770
  %v838 = vpop.f32.mrb[0].mxu0
  %v839 = vadd.f32 0.0, %v838
  %v840 = vpop.f32.mrb[0].mxu0
  %841 = vdwg.mxu0
  %v842 = vld [vmem:[%s3] sm:$0x1]
  %v844 = vlaneseq
  %v845 = vshrl.u32 %v844, 7
  %v846 = vsub.s32 0, %v845
  %v847 = vrot.slane %v842, %v846
  %v849 = vmul.f32 %v839, %v847
  %v850 = vld [vmem:[%s4] sm:$0x1]
  %v851 = vmul.f32 %v766, %v849
  %v853 = vlaneseq
  %v854 = vshrl.u32 %v853, 7
  %v855 = vsub.s32 0, %v854
  %v856 = vrot.slane %v850, %v855
  %v858 = vsub.f32 %v856, %v851
  %v861 = vunpack.c.l.s4 1966171168
  %v862 = vunpack.c.0.s8 %v861
  %v863 = vlaneseq
  %v864 = vshrl.u32 %v863, 7
  %v865 = vsub.s32 %v862, %v864
  %v866 = vrot.slane %v849, %v865
  %v867 = vcombine.high %v866, %v866
  %v869 = vunpack.c.l.s4 1966171168
  %v870 = vunpack.c.0.s8 %v869
  %v871 = vlaneseq
  %v872 = vshrl.u32 %v871, 7
  %v873 = vsub.s32 %v870, %v872
  %v874 = vrot.slane %v866, %v873
  %v876 = vunpack.c.l.s4 1966171168
  %v877 = vunpack.c.0.s8 %v876
  %v878 = vlaneseq
  %v879 = vshrl.u32 %v878, 7
  %v880 = vsub.s32 %v877, %v879
  %v881 = vrot.slane %v867, %v880
  %v882 = vlaneseq
  %v883 = vshrl.u32 %v882, 7
  %v884 = vsub.s32 0, %v883
  %v885 = vrot.slane %v874, %v884
  %v886 = vlaneseq
  %v887 = vshrl.u32 %v886, 7
  %v888 = vsub.s32 0, %v887
  %v889 = vrot.slane %v881, %v888
  %v892 = vmul.f32 %v484, %v885
  %v893 = vmul.f32 %v485, %v885
  %v894 = vmul.f32 %v486, %v889
  %v895 = vmul.f32 %v487, %v889
  %v898 = vunpack.c.l.s4 1966171168
  %v899 = vunpack.c.0.s8 %v898
  %v900 = vlaneseq
  %v901 = vshrl.u32 %v900, 7
  %v902 = vsub.s32 %v899, %v901
  %v903 = vrot.slane %v858, %v902
  %v904 = vcombine.high %v903, %v903
  %v906 = vunpack.c.l.s4 1966171168
  %v907 = vunpack.c.0.s8 %v906
  %v908 = vlaneseq
  %v909 = vshrl.u32 %v908, 7
  %v910 = vsub.s32 %v907, %v909
  %v911 = vrot.slane %v903, %v910
  %v913 = vunpack.c.l.s4 1966171168
  %v914 = vunpack.c.0.s8 %v913
  %v915 = vlaneseq
  %v916 = vshrl.u32 %v915, 7
  %v917 = vsub.s32 %v914, %v916
  %v918 = vrot.slane %v904, %v917
  %v919 = vlaneseq
  %v920 = vshrl.u32 %v919, 7
  %v921 = vsub.s32 0, %v920
  %v922 = vrot.slane %v911, %v921
  %v923 = vlaneseq
  %v924 = vshrl.u32 %v923, 7
  %v925 = vsub.s32 0, %v924
  %v926 = vrot.slane %v918, %v925
  %v929 = vadd.f32 %v892, %v922
  %v930 = vadd.f32 %v893, %v922
  %v931 = vadd.f32 %v894, %v926
  %v932 = vadd.f32 %v895, %v926
  %v933 = vmin.f32 %v929, 20.0
  %v934 = vmin.f32 %v930, 20.0
  %v935 = vmin.f32 %v931, 20.0
  %v936 = vmin.f32 %v932, 20.0
  %v937 = vmul.f32 %v933, 1.442695
  %v938 = vpow.pop %v937
  %v939 = vmul.f32 %v934, 1.442695
  %v940 = vpow.pop %v939
  %v941 = vmul.f32 %v935, 1.442695
  %v942 = vpow.pop %v941
  %v943 = vmul.f32 %v936, 1.442695
  %v944 = vpow.pop %v943
  %v945 = vadd.f32 %v938, 1.0
  %v946 = vadd.f32 %v940, 1.0
  %v947 = vadd.f32 %v942, 1.0
  %v948 = vadd.f32 %v944, 1.0
  %v949 = vmul.f32 %v945, %v945
  %v950 = vmul.f32 %v946, %v946
  %v951 = vmul.f32 %v947, %v947
  %v952 = vmul.f32 %v948, %v948
  %vm953 = vcmp.gt.f32.partialorder %v929, 20.0
  %vm954 = vcmp.gt.f32.partialorder %v930, 20.0
  %vm955 = vcmp.gt.f32.partialorder %v931, 20.0
  %vm956 = vcmp.gt.f32.partialorder %v932, 20.0
  %v957 = vsub.f32 %v949, 1.0
  %v958 = vsub.f32 %v950, 1.0
  %v959 = vsub.f32 %v951, 1.0
  %v960 = vsub.f32 %v952, 1.0
  %v961 = vadd.f32 %v949, 1.0
  %v962 = vadd.f32 %v950, 1.0
  %v963 = vadd.f32 %v951, 1.0
  %v964 = vadd.f32 %v952, 1.0
  %v965 = vrcp.pop %v961
  %v966 = vmul.f32 %v957, %v965
  %v967 = vrcp.pop %v962
  %v968 = vmul.f32 %v958, %v967
  %v969 = vrcp.pop %v963
  %v970 = vmul.f32 %v959, %v969
  %v971 = vrcp.pop %v964
  %v972 = vmul.f32 %v960, %v971
  %v973 = vmul.f32 %v929, %v966
  %v974 = vmul.f32 %v930, %v968
  %v975 = vmul.f32 %v931, %v970
  %v976 = vmul.f32 %v932, %v972
  %v977 = vsel %vm953, %v929, %v973
  %v978 = vsel %vm954, %v930, %v974
  %v979 = vsel %vm955, %v931, %v975
  %v980 = vsel %vm956, %v932, %v976
  %v981 = vld [vmem:[%s7] sm:$0xff]
  %v982 = vld [vmem:[%s7 + $0x8] sm:$0xff]
  %v983 = vld [vmem:[%s7 + $0x10] sm:$0xff]
  %v984 = vld [vmem:[%s7 + $0x18] sm:$0xff]
  %v985 = vld [vmem:[%s7 + $0x20] sm:$0xff]
  %v986 = vld [vmem:[%s7 + $0x28] sm:$0xff]
  %v987 = vld [vmem:[%s7 + $0x30] sm:$0xff]
  %v988 = vld [vmem:[%s7 + $0x38] sm:$0xff]
  %v990 = vsel %vm488, %v977, 0
  %v993 = vsel %vm488, %v978, 0
  %v996 = vsel %vm488, %v979, 0
  %v999 = vsel %vm488, %v980, 0
  %1001 = vmatprep.subr.mxu0 0.0
  %1002 = vmatpush1.msra.mxu0 %v981
  %1003 = vmatprep.subr.mxu0 0.0
  %1004 = vmatpush1.msra.mxu0 %v982
  %1005 = vmatprep.subr.mxu0 0.0
  %1006 = vmatpush1.msra.mxu0 %v983
  %1007 = vmatprep.subr.mxu0 0.0
  %1008 = vmatpush1.msra.mxu0 %v984
  %1009 = vmatprep.subr.mxu0 0.0
  %1010 = vmatpush1.msra.mxu0 %v985
  %1011 = vmatprep.subr.mxu0 0.0
  %1012 = vmatpush1.msra.mxu0 %v986
  %1013 = vmatprep.subr.mxu0 0.0
  %1014 = vmatpush1.msra.mxu0 %v987
  %1015 = vmatprep.subr.mxu0 0.0
  %1016 = vmatpush1.msra.mxu0 %v988
  %1017 = vmatprep.subr.mxu0 0.0
  %1018 = vmatpush1.msra.mxu0 0.0
  %1019 = vmatprep.subr.mxu0 0.0
  %1020 = vmatpush1.msra.mxu0 0.0
  %1021 = vmatprep.subr.mxu0 0.0
  %1022 = vmatpush1.msra.mxu0 0.0
  %1023 = vmatprep.subr.mxu0 0.0
  %1024 = vmatpush1.msra.mxu0 0.0
  %1025 = vmatprep.subr.mxu0 0.0
  %1026 = vmatpush1.msra.mxu0 0.0
  %1027 = vmatprep.subr.mxu0 0.0
  %1028 = vmatpush1.msra.mxu0 0.0
  %1029 = vmatprep.subr.mxu0 0.0
  %1030 = vmatpush1.msra.mxu0 0.0
  %1031 = vmatprep.subr.mxu0 0.0
  %1032 = vmatpush1.msra.mxu0 0.0
  %1033 = vmatprep.subr.mxu0 0.0
  %1034 = vmatpush1.msra.mxu0 0.0
  %1035 = vmatprep.subr.mxu0 0.0
  %1036 = vmatpush1.msra.mxu0 0.0
  %1037 = vmatprep.subr.mxu0 0.0
  %1038 = vmatpush1.msra.mxu0 0.0
  %1039 = vmatprep.subr.mxu0 0.0
  %1040 = vmatpush1.msra.mxu0 0.0
  %1041 = vmatprep.subr.mxu0 0.0
  %1042 = vmatpush1.msra.mxu0 0.0
  %1043 = vmatprep.subr.mxu0 0.0
  %1044 = vmatpush1.msra.mxu0 0.0
  %1045 = vmatprep.subr.mxu0 0.0
  %1046 = vmatpush1.msra.mxu0 0.0
  %1047 = vmatprep.subr.mxu0 0.0
  %1048 = vmatpush1.msra.mxu0 0.0
  %1049 = vmatprep.subr.mxu0 0.0
  %1050 = vmatpush1.msra.mxu0 0.0
  %1051 = vmatprep.subr.mxu0 0.0
  %1052 = vmatpush1.msra.mxu0 0.0
  %1053 = vmatprep.subr.mxu0 0.0
  %1054 = vmatpush1.msra.mxu0 0.0
  %1055 = vmatprep.subr.mxu0 0.0
  %1056 = vmatpush1.msra.mxu0 0.0
  %1057 = vmatprep.subr.mxu0 0.0
  %1058 = vmatpush1.msra.mxu0 0.0
  %1059 = vmatprep.subr.mxu0 0.0
  %1060 = vmatpush1.msra.mxu0 0.0
  %1061 = vmatprep.subr.mxu0 0.0
  %1062 = vmatpush1.msra.mxu0 0.0
  %1063 = vmatprep.subr.mxu0 0.0
  %1064 = vmatpush1.msra.mxu0 0.0
  %1065 = vmatprep.mubr.f32.mxu0 0.0
  %1066 = vmatmul.mubr.f32.gmra.mrb[0].mxu0 %v990
  %v1067 = vpop.f32.mrb[0].mxu0
  %v1068 = vadd.f32 0.0, %v1067
  %v1069 = vpop.f32.mrb[0].mxu0
  %1070 = vmatprep.mubr.f32.mxu0 0.0
  %1071 = vmatmul.mubr.f32.gmra.mrb[0].mxu0 %v993
  %v1072 = vpop.f32.mrb[0].mxu0
  %v1073 = vadd.f32 0.0, %v1072
  %v1074 = vpop.f32.mrb[0].mxu0
  %1075 = vmatprep.mubr.f32.mxu0 0.0
  %1076 = vmatmul.mubr.f32.gmra.mrb[0].mxu0 %v996
  %v1077 = vpop.f32.mrb[0].mxu0
  %v1078 = vadd.f32 0.0, %v1077
  %v1079 = vpop.f32.mrb[0].mxu0
  %1080 = vmatprep.mubr.f32.mxu0 0.0
  %1081 = vmatmul.mubr.f32.gmra.mrb[0].mxu0 %v999
  %v1082 = vpop.f32.mrb[0].mxu0
  %v1083 = vadd.f32 0.0, %v1082
  %v1084 = vpop.f32.mrb[0].mxu0
  %1085 = vdwg.mxu0
  %v1086 = vrot.slane %v1068, 7
  %v1087 = vrot.slane %v1073, 7
  %v1088 = vrot.slane %v1078, 7
  %v1089 = vrot.slane %v1083, 7
  %v1090 = vsel %vm141, %v1088, %v1089
  %v1091 = vsel %vm141, %v1087, %v1088
  %v1092 = vsel %vm141, %v1086, %v1087
  %v1093 = vsel %vm141, %v1089, %v1086
  %v1094 = vmul.f32 %v1093, %v105
  %v1095 = vmul.f32 %v1092, %v106
  %v1096 = vmul.f32 %v1091, %v107
  %v1097 = vmul.f32 %v1090, %v108
  %s1098 = scalar_lea.vmem %s7, 64
  %v1099 = vld [vmem:[%s1098] sm:$0xff]
  %v1100 = vld [vmem:[%s1098 + $0x8] sm:$0xff]
  %v1101 = vld [vmem:[%s1098 + $0x10] sm:$0xff]
  %v1102 = vld [vmem:[%s1098 + $0x18] sm:$0xff]
  %v1103 = vld [vmem:[%s1098 + $0x20] sm:$0xff]
  %v1104 = vld [vmem:[%s1098 + $0x28] sm:$0xff]
  %v1105 = vld [vmem:[%s1098 + $0x30] sm:$0xff]
  %v1106 = vld [vmem:[%s1098 + $0x38] sm:$0xff]
  %1107 = vmatprep.subr.mxu0 0.0
  %1108 = vmatpush1.msra.mxu0 %v1099
  %1109 = vmatprep.subr.mxu0 0.0
  %1110 = vmatpush1.msra.mxu0 %v1100
  %1111 = vmatprep.subr.mxu0 0.0
  %1112 = vmatpush1.msra.mxu0 %v1101
  %1113 = vmatprep.subr.mxu0 0.0
  %1114 = vmatpush1.msra.mxu0 %v1102
  %1115 = vmatprep.subr.mxu0 0.0
  %1116 = vmatpush1.msra.mxu0 %v1103
  %1117 = vmatprep.subr.mxu0 0.0
  %1118 = vmatpush1.msra.mxu0 %v1104
  %1119 = vmatprep.subr.mxu0 0.0
  %1120 = vmatpush1.msra.mxu0 %v1105
  %1121 = vmatprep.subr.mxu0 0.0
  %1122 = vmatpush1.msra.mxu0 %v1106
  %1123 = vmatprep.subr.mxu0 0.0
  %1124 = vmatpush1.msra.mxu0 0.0
  %1125 = vmatprep.subr.mxu0 0.0
  %1126 = vmatpush1.msra.mxu0 0.0
  %1127 = vmatprep.subr.mxu0 0.0
  %1128 = vmatpush1.msra.mxu0 0.0
  %1129 = vmatprep.subr.mxu0 0.0
  %1130 = vmatpush1.msra.mxu0 0.0
  %1131 = vmatprep.subr.mxu0 0.0
  %1132 = vmatpush1.msra.mxu0 0.0
  %1133 = vmatprep.subr.mxu0 0.0
  %1134 = vmatpush1.msra.mxu0 0.0
  %1135 = vmatprep.subr.mxu0 0.0
  %1136 = vmatpush1.msra.mxu0 0.0
  %1137 = vmatprep.subr.mxu0 0.0
  %1138 = vmatpush1.msra.mxu0 0.0
  %1139 = vmatprep.subr.mxu0 0.0
  %1140 = vmatpush1.msra.mxu0 0.0
  %1141 = vmatprep.subr.mxu0 0.0
  %1142 = vmatpush1.msra.mxu0 0.0
  %1143 = vmatprep.subr.mxu0 0.0
  %1144 = vmatpush1.msra.mxu0 0.0
  %1145 = vmatprep.subr.mxu0 0.0
  %1146 = vmatpush1.msra.mxu0 0.0
  %1147 = vmatprep.subr.mxu0 0.0
  %1148 = vmatpush1.msra.mxu0 0.0
  %1149 = vmatprep.subr.mxu0 0.0
  %1150 = vmatpush1.msra.mxu0 0.0
  %1151 = vmatprep.subr.mxu0 0.0
  %1152 = vmatpush1.msra.mxu0 0.0
  %1153 = vmatprep.subr.mxu0 0.0
  %1154 = vmatpush1.msra.mxu0 0.0
  %1155 = vmatprep.subr.mxu0 0.0
  %1156 = vmatpush1.msra.mxu0 0.0
  %1157 = vmatprep.subr.mxu0 0.0
  %1158 = vmatpush1.msra.mxu0 0.0
  %1159 = vmatprep.subr.mxu0 0.0
  %1160 = vmatpush1.msra.mxu0 0.0
  %1161 = vmatprep.subr.mxu0 0.0
  %1162 = vmatpush1.msra.mxu0 0.0
  %1163 = vmatprep.subr.mxu0 0.0
  %1164 = vmatpush1.msra.mxu0 0.0
  %1165 = vmatprep.subr.mxu0 0.0
  %1166 = vmatpush1.msra.mxu0 0.0
  %1167 = vmatprep.subr.mxu0 0.0
  %1168 = vmatpush1.msra.mxu0 0.0
  %1169 = vmatprep.subr.mxu0 0.0
  %1170 = vmatpush1.msra.mxu0 0.0
  %1171 = vmatprep.mubr.f32.mxu0 0.0
  %1172 = vmatmul.mubr.f32.gmra.mrb[0].mxu0 %v990
  %v1173 = vpop.f32.mrb[0].mxu0
  %v1174 = vadd.f32 0.0, %v1173
  %v1175 = vpop.f32.mrb[0].mxu0
  %1176 = vmatprep.mubr.f32.mxu0 0.0
  %1177 = vmatmul.mubr.f32.gmra.mrb[0].mxu0 %v993
  %v1178 = vpop.f32.mrb[0].mxu0
  %v1179 = vadd.f32 0.0, %v1178
  %v1180 = vpop.f32.mrb[0].mxu0
  %1181 = vmatprep.mubr.f32.mxu0 0.0
  %1182 = vmatmul.mubr.f32.gmra.mrb[0].mxu0 %v996
  %v1183 = vpop.f32.mrb[0].mxu0
  %v1184 = vadd.f32 0.0, %v1183
  %v1185 = vpop.f32.mrb[0].mxu0
  %1186 = vmatprep.mubr.f32.mxu0 0.0
  %1187 = vmatmul.mubr.f32.gmra.mrb[0].mxu0 %v999
  %v1188 = vpop.f32.mrb[0].mxu0
  %v1189 = vadd.f32 0.0, %v1188
  %v1190 = vpop.f32.mrb[0].mxu0
  %1191 = vdwg.mxu0
  %v1192 = vadd.f32 %v1094, %v1174
  %v1193 = vadd.f32 %v1095, %v1179
  %v1194 = vadd.f32 %v1096, %v1184
  %v1195 = vadd.f32 %v1097, %v1189
  %s1196 = scalar_lea.vmem %s7, 128
  %v1197 = vld [vmem:[%s1196] sm:$0xff]
  %v1198 = vld [vmem:[%s1196 + $0x8] sm:$0xff]
  %v1199 = vld [vmem:[%s1196 + $0x10] sm:$0xff]
  %v1200 = vld [vmem:[%s1196 + $0x18] sm:$0xff]
  %v1201 = vld [vmem:[%s1196 + $0x20] sm:$0xff]
  %v1202 = vld [vmem:[%s1196 + $0x28] sm:$0xff]
  %v1203 = vld [vmem:[%s1196 + $0x30] sm:$0xff]
  %v1204 = vld [vmem:[%s1196 + $0x38] sm:$0xff]
  %1205 = vmatprep.subr.mxu0 0.0
  %1206 = vmatpush1.msra.mxu0 %v1197
  %1207 = vmatprep.subr.mxu0 0.0
  %1208 = vmatpush1.msra.mxu0 %v1198
  %1209 = vmatprep.subr.mxu0 0.0
  %1210 = vmatpush1.msra.mxu0 %v1199
  %1211 = vmatprep.subr.mxu0 0.0
  %1212 = vmatpush1.msra.mxu0 %v1200
  %1213 = vmatprep.subr.mxu0 0.0
  %1214 = vmatpush1.msra.mxu0 %v1201
  %1215 = vmatprep.subr.mxu0 0.0
  %1216 = vmatpush1.msra.mxu0 %v1202
  %1217 = vmatprep.subr.mxu0 0.0
  %1218 = vmatpush1.msra.mxu0 %v1203
  %1219 = vmatprep.subr.mxu0 0.0
  %1220 = vmatpush1.msra.mxu0 %v1204
  %1221 = vmatprep.subr.mxu0 0.0
  %1222 = vmatpush1.msra.mxu0 0.0
  %1223 = vmatprep.subr.mxu0 0.0
  %1224 = vmatpush1.msra.mxu0 0.0
  %1225 = vmatprep.subr.mxu0 0.0
  %1226 = vmatpush1.msra.mxu0 0.0
  %1227 = vmatprep.subr.mxu0 0.0
  %1228 = vmatpush1.msra.mxu0 0.0
  %1229 = vmatprep.subr.mxu0 0.0
  %1230 = vmatpush1.msra.mxu0 0.0
  %1231 = vmatprep.subr.mxu0 0.0
  %1232 = vmatpush1.msra.mxu0 0.0
  %1233 = vmatprep.subr.mxu0 0.0
  %1234 = vmatpush1.msra.mxu0 0.0
  %1235 = vmatprep.subr.mxu0 0.0
  %1236 = vmatpush1.msra.mxu0 0.0
  %1237 = vmatprep.subr.mxu0 0.0
  %1238 = vmatpush1.msra.mxu0 0.0
  %1239 = vmatprep.subr.mxu0 0.0
  %1240 = vmatpush1.msra.mxu0 0.0
  %1241 = vmatprep.subr.mxu0 0.0
  %1242 = vmatpush1.msra.mxu0 0.0
  %1243 = vmatprep.subr.mxu0 0.0
  %1244 = vmatpush1.msra.mxu0 0.0
  %1245 = vmatprep.subr.mxu0 0.0
  %1246 = vmatpush1.msra.mxu0 0.0
  %1247 = vmatprep.subr.mxu0 0.0
  %1248 = vmatpush1.msra.mxu0 0.0
  %1249 = vmatprep.subr.mxu0 0.0
  %1250 = vmatpush1.msra.mxu0 0.0
  %1251 = vmatprep.subr.mxu0 0.0
  %1252 = vmatpush1.msra.mxu0 0.0
  %1253 = vmatprep.subr.mxu0 0.0
  %1254 = vmatpush1.msra.mxu0 0.0
  %1255 = vmatprep.subr.mxu0 0.0
  %1256 = vmatpush1.msra.mxu0 0.0
  %1257 = vmatprep.subr.mxu0 0.0
  %1258 = vmatpush1.msra.mxu0 0.0
  %1259 = vmatprep.subr.mxu0 0.0
  %1260 = vmatpush1.msra.mxu0 0.0
  %1261 = vmatprep.subr.mxu0 0.0
  %1262 = vmatpush1.msra.mxu0 0.0
  %1263 = vmatprep.subr.mxu0 0.0
  %1264 = vmatpush1.msra.mxu0 0.0
  %1265 = vmatprep.subr.mxu0 0.0
  %1266 = vmatpush1.msra.mxu0 0.0
  %1267 = vmatprep.subr.mxu0 0.0
  %1268 = vmatpush1.msra.mxu0 0.0
  %1269 = vmatprep.mubr.f32.mxu0 0.0
  %1270 = vmatmul.mubr.f32.gmra.mrb[0].mxu0 %v990
  %v1271 = vpop.f32.mrb[0].mxu0
  %v1272 = vadd.f32 0.0, %v1271
  %v1273 = vpop.f32.mrb[0].mxu0
  %1274 = vmatprep.mubr.f32.mxu0 0.0
  %1275 = vmatmul.mubr.f32.gmra.mrb[0].mxu0 %v993
  %v1276 = vpop.f32.mrb[0].mxu0
  %v1277 = vadd.f32 0.0, %v1276
  %v1278 = vpop.f32.mrb[0].mxu0
  %1279 = vmatprep.mubr.f32.mxu0 0.0
  %1280 = vmatmul.mubr.f32.gmra.mrb[0].mxu0 %v996
  %v1281 = vpop.f32.mrb[0].mxu0
  %v1282 = vadd.f32 0.0, %v1281
  %v1283 = vpop.f32.mrb[0].mxu0
  %1284 = vmatprep.mubr.f32.mxu0 0.0
  %1285 = vmatmul.mubr.f32.gmra.mrb[0].mxu0 %v999
  %v1286 = vpop.f32.mrb[0].mxu0
  %v1287 = vadd.f32 0.0, %v1286
  %v1288 = vpop.f32.mrb[0].mxu0
  %1289 = vdwg.mxu0
  %v1290 = vrot.slane %v1272, 1
  %v1291 = vrot.slane %v1277, 1
  %v1292 = vrot.slane %v1282, 1
  %v1293 = vrot.slane %v1287, 1
  %v1294 = vsel %vm361, %v1292, %v1293
  %v1295 = vsel %vm361, %v1291, %v1292
  %v1296 = vsel %vm361, %v1290, %v1291
  %v1297 = vsel %vm361, %v1293, %v1290
  %v1298 = vmul.f32 %v1296, %v129
  %v1299 = vmul.f32 %v1295, %v130
  %v1300 = vmul.f32 %v1294, %v131
  %v1301 = vmul.f32 %v1297, %v132
  %v1302 = vadd.f32 %v1192, %v1298
  %v1303 = vadd.f32 %v1193, %v1299
  %v1304 = vadd.f32 %v1194, %v1300
  %v1305 = vadd.f32 %v1195, %v1301
  %v1306 = vld [vmem:[%s8] sm:$0x1]
  %v1308 = vlaneseq
  %v1309 = vshrl.u32 %v1308, 7
  %v1310 = vsub.s32 0, %v1309
  %v1311 = vrot.slane %v1306, %v1310
  %v1313 = vadd.f32 %v1302, %v1311
  %v1314 = vadd.f32 %v1303, %v1311
  %v1315 = vadd.f32 %v1304, %v1311
  %v1316 = vadd.f32 %v1305, %v1311
  %vm1317 = vcmask 15360
  %1318 = vst.msk [vmem:[%s9] sm:$0xff] %vm1317, %v1313
  %1319 = vst.msk [vmem:[%s9 + $0x8] sm:$0xff] %vm1317, %v1314
  %1320 = vst.msk [vmem:[%s9 + $0x10] sm:$0xff] %vm1317, %v1315
  %1321 = vst.msk [vmem:[%s9 + $0x18] sm:$0xff] %vm1317, %v1316
  // Predicated region
  $region38: #{tpu_custom_call.1} parent=0 // pred_check
    _
  $region39: #{tpu_custom_call.1} parent=0 // pred_check_branch
    %1323 = sbr.rel (0) target = $region41
  $region40: #{tpu_custom_call.1} parent=0 // pred_region
    _
  $region41: #{tpu_custom_call.1} parent=0 // pred_fallthru
    _
  // Predicated region
  $region42: #{tpu_custom_call.1} parent=0 // pred_check
    _
  $region43: #{tpu_custom_call.1} parent=0 // pred_check_branch
    %1325 = sbr.rel (0) target = $region45
  $region44: #{tpu_custom_call.1} parent=0 // pred_region
    _
  $region45: #{tpu_custom_call.1} parent=0 // pred_fallthru
    _

</llo_original>
